<compile_context>
chip_gen: v5e
topology: v5e:2x2
jax: 0.10.0
libtpu: 0.0.40
codegen_flags: <defaults>
</compile_context>

<pallas_src>
import functools

import jax
import jax.numpy as jnp
from jax.experimental import pallas as pl


# ----------------------------------------------------------------------------
# Fused kernel: LSTM layer 0 + LSTM layer 1 + residual combine + dense head.
# ----------------------------------------------------------------------------
def _pred_fused_kernel(x_ref, w0i_ref, w0h_ref, b0_ref,
                       w1i_ref, w1h_ref, b1_ref,
                       w12_ref, b12_ref, labels_ref, out_ref,
                       *, seq_len, batch):
    T, B = seq_len, batch
    H = w0h_ref.shape[0]                  # hidden size (w0h is (H, 4H))
    f32 = jnp.float32
    bf16 = jnp.bfloat16

    # Small VMEM-resident operands, loaded once.
    w0h = w0h_ref[...]                    # (H, 4H)  W_hh0^T, i/f/o cols * 0.5, bf16
    w1i = w1i_ref[...]                    # (H, 4H)  W_ih1^T, prescaled, bf16
    w1h = w1h_ref[...]                    # (H, 4H)  W_hh1^T, prescaled, bf16
    b1 = b1_ref[...]                      # (1, 4H)  (b_ih1 + b_hh1), prescaled, f32

    def cell(gates, c_prev):
        # `gates` has its i/f/o columns pre-scaled by 0.5, so ONE full-width
        # tanh (single EUP pass) yields tanh(z/2) for i/f/o and tanh(z) for g;
        # sigmoid(z) = 0.5*tanh(z/2) + 0.5 is recovered with cheap VPU ops.
        th = jnp.tanh(gates)
        i = 0.5 * th[:, 0 * H:1 * H] + 0.5
        g = th[:, 2 * H:3 * H]
        o = 0.5 * th[:, 3 * H:4 * H] + 0.5
        if c_prev is None:                # peeled t = 0: c_prev == 0
            c = i * g
        else:
            f = 0.5 * th[:, 1 * H:2 * H] + 0.5
            c = f * c_prev + i * g
        h = o * jnp.tanh(c)
        return h, c

    # Hoisted layer-0 input projection: one (T*B, D) x (D, 4H) MXU dot (+bias)
    # off the serial chain.  Per-step reads below are static sublane slices.
    xw0 = jnp.dot(x_ref[...], w0i_ref[...],
                  preferred_element_type=f32) + b0_ref[...]        # (T*B, 4H)

    # ---- peeled t = 0 (h = c = 0: no recurrent dots, no f*c_prev) ----------
    h1, c1 = cell(xw0[0:B, :], None)
    g1 = jnp.dot(h1.astype(bf16), w1i, preferred_element_type=f32) + b1
    h2, c2 = cell(g1, None)

    # ---- steps 1 .. T-2: full cells for both layers -------------------------
    for t in range(1, T - 1):
        g0 = xw0[t * B:(t + 1) * B, :] + jnp.dot(
            h1.astype(bf16), w0h, preferred_element_type=f32)
        h1, c1 = cell(g0, c1)
        g1 = (jnp.dot(h1.astype(bf16), w1i, preferred_element_type=f32)
              + jnp.dot(h2.astype(bf16), w1h, preferred_element_type=f32) + b1)
        h2, c2 = cell(g1, c2)

    # ---- step T-1: layer-0 full cell; layer-1 only the gate pre-activation.
    # out2[T-1]/c2[T-1] are dead in the reference forward, and the residual o1
    # is exactly the layer-1 o-gate pre-activation of this step (computed
    # against h2 == out2[T-2]) -> reuse it, no extra (H,H) dots or slices.
    g0 = xw0[(T - 1) * B:T * B, :] + jnp.dot(
        h1.astype(bf16), w0h, preferred_element_type=f32)
    h1, c1 = cell(g0, c1)                 # h1 == out1[T-1]
    g1 = (jnp.dot(h1.astype(bf16), w1i, preferred_element_type=f32)
          + jnp.dot(h2.astype(bf16), w1h, preferred_element_type=f32) + b1)
    o1 = 2.0 * g1[:, 3 * H:4 * H]         # undo the 0.5 o-column prescale (exact)
    res = h2 + o1 * h1                    # h2 == out2[T-2]

    # ---- collapsed dense head: one dot + combined bias + mean(labels) ------
    lmean = jnp.mean(labels_ref[...], axis=1, keepdims=True)       # (B, 1)
    out_ref[...] = (jnp.dot(res.astype(bf16), w12_ref[...],
                            preferred_element_type=f32)
                    + b12_ref[...] + lmean)


# ----------------------------------------------------------------------------
# One-time (outside-jit) parameter preprocessing.
# ----------------------------------------------------------------------------
def prepare_params(p):
    H = p["whh0"].shape[1]
    # Gate order along the 4H axis is i, f, g, o.  Scale i/f/o by 0.5 (exact,
    # power of two) to enable the single-tanh gate evaluation in the kernel.
    s = jnp.concatenate([jnp.full((H,), 0.5, jnp.float32),
                         jnp.full((H,), 0.5, jnp.float32),
                         jnp.ones((H,), jnp.float32),
                         jnp.full((H,), 0.5, jnp.float32)])

    def wq(w):                             # transpose, prescale, bf16 for MXU
        return (w.T.astype(jnp.float32) * s[None, :]).astype(jnp.bfloat16)

    def bq(bi, bh):                        # pre-summed, prescaled, f32
        return ((bi + bh).astype(jnp.float32) * s).reshape(1, -1)

    # dense_1 and dense_2 have no activation between them -> collapse.
    w12 = (p["w2"] @ p["w1"]).T            # (H, H2) == W1^T @ W2^T
    b12 = (p["b1"] @ p["w2"].T + p["b2"] + p["bias"]).reshape(1, -1)

    return {
        "w0i": wq(p["wih0"]),              # (D, 4H) bf16
        "w0h": wq(p["whh0"]),              # (H, 4H) bf16
        "b0": bq(p["bih0"], p["bhh0"]),    # (1, 4H) f32
        "w1i": wq(p["wih1"]),              # (H, 4H) bf16
        "w1h": wq(p["whh1"]),              # (H, 4H) bf16
        "b1": bq(p["bih1"], p["bhh1"]),    # (1, 4H) f32
        "w12": w12.astype(jnp.bfloat16),   # (H, H2) bf16
        "b12": b12.astype(jnp.float32),    # (1, H2) f32 (includes free bias)
    }


@jax.jit
def pred_forward(prep, inputs, true_labels):
    """inputs: (B, T, D) float32, true_labels: (B, L) float32 -> (B, H2)."""
    B, T, D = inputs.shape
    if T < 2:
        raise ValueError("RLSTM forward indexes lstm[-2]; needs seq_len >= 2")
    H2 = prep["w12"].shape[1]
    # Time-major slab for the hoisted input projection; bf16 for the MXU.
    x_tb = jnp.transpose(inputs.astype(jnp.float32), (1, 0, 2))
    x_tb = x_tb.reshape(T * B, D).astype(jnp.bfloat16)
    kernel = functools.partial(_pred_fused_kernel, seq_len=T, batch=B)
    return pl.pallas_call(
        kernel,
        out_shape=jax.ShapeDtypeStruct((B, H2), jnp.float32),
    )(x_tb,
      prep["w0i"], prep["w0h"], prep["b0"],
      prep["w1i"], prep["w1h"], prep["b1"],
      prep["w12"], prep["b12"],
      true_labels.astype(jnp.float32))


# ----------------------------------------------------------------------------
# Parameter init (deterministic, matches the PyTorch module's shapes).
# ----------------------------------------------------------------------------
def init_params(key, D, H, H1, H2, L):
    ks = list(jax.random.split(key, 16))

    def uni(k, shape, bound):
        return jax.random.uniform(k, shape, jnp.float32, -bound, bound)

    kb = 1.0 / float(jnp.sqrt(H))
    p = {}
    # LSTM layer 0 (input_size = D)
    p["wih0"] = uni(ks[0], (4 * H, D), kb)
    p["whh0"] = uni(ks[1], (4 * H, H), kb)
    p["bih0"] = uni(ks[2], (4 * H,), kb)
    p["bhh0"] = uni(ks[3], (4 * H,), kb)
    # LSTM layer 1 (input_size = H)
    p["wih1"] = uni(ks[4], (4 * H, H), kb)
    p["whh1"] = uni(ks[5], (4 * H, H), kb)
    p["bih1"] = uni(ks[6], (4 * H,), kb)
    p["bhh1"] = uni(ks[7], (4 * H,), kb)
    # dense_1 / dense_2
    k1 = 1.0 / float(jnp.sqrt(H))
    p["w1"] = uni(ks[8], (H1, H), k1)
    p["b1"] = uni(ks[9], (H1,), k1)
    k2 = 1.0 / float(jnp.sqrt(H1))
    p["w2"] = uni(ks[10], (H2, H1), k2)
    p["b2"] = uni(ks[11], (H2,), k2)
    # free bias parameter ~ N(0, 1)
    p["bias"] = jax.random.normal(ks[12], (H2,), jnp.float32)
    # dense_3 exists in __init__ but is unused in forward -> omitted.
    return p


# ----------------------------------------------------------------------------
# Pure-JAX reference (mirrors the PyTorch forward exactly, all f32).
# ----------------------------------------------------------------------------
def _lstm_ref(x, wih, whh, bih, bhh):
    T, B, _ = x.shape
    H = whh.shape[1]

    def step(carry, xt):
        h, c = carry
        gates = xt @ wih.T + h @ whh.T + bih + bhh
        i = jax.nn.sigmoid(gates[:, :H])
        f = jax.nn.sigmoid(gates[:, H:2 * H])
        g = jnp.tanh(gates[:, 2 * H:3 * H])
        o = jax.nn.sigmoid(gates[:, 3 * H:])
        c = f * c + i * g
        h = o * jnp.tanh(c)
        return (h, c), h

    (_, _), ys = jax.lax.scan(step, (jnp.zeros((B, H)), jnp.zeros((B, H))), x)
    return ys


def pred_forward_ref(p, inputs, true_labels):
    H = p["whh0"].shape[1]
    x = jnp.transpose(inputs, (1, 0, 2))
    out1 = _lstm_ref(x, p["wih0"], p["whh0"], p["bih0"], p["bhh0"])
    out2 = _lstm_ref(out1, p["wih1"], p["whh1"], p["bih1"], p["bhh1"])
    h2, l1 = out2[-2], out1[-1]
    o1 = (h2 @ p["whh1"][3 * H:].T + l1 @ p["wih1"][3 * H:].T
          + p["bih1"][3 * H:] + p["bhh1"][3 * H:])
    res = h2 + o1 * l1
    d1 = res @ p["w1"].T + p["b1"]
    d2 = d1 @ p["w2"].T + p["b2"]
    return d2 + jnp.mean(true_labels, axis=1, keepdims=True) + p["bias"]


if __name__ == "__main__":
    B, T, D = 8, 8, 16            # batch, seq, input_dim
    H, H1, H2, L = 32, 32, 16, 8  # hidden_LSTM, hidden_size_1, hidden_size_2, dim_label

    key = jax.random.PRNGKey(0)
    k_in, k_lab, k_par = jax.random.split(key, 3)
    inputs = jax.random.normal(k_in, (B, T, D), jnp.float32)
    true_labels = jax.random.normal(k_lab, (B, L), jnp.float32)
    params = init_params(k_par, D, H, H1, H2, L)
    prep = prepare_params(params)          # one-time preprocessing, outside jit

    out = pred_forward(prep, inputs, true_labels)
    out = jax.block_until_ready(out)

    ref = pred_forward_ref(params, inputs, true_labels)
    assert out.shape == (B, H2), out.shape
    assert bool(jnp.all(jnp.isfinite(out)))
    # bf16 MXU operands (f32 accumulation) -> compare with a 2e-2 tolerance.
    assert bool(jnp.allclose(out, ref, rtol=2e-2, atol=2e-2)), (
        float(jnp.max(jnp.abs(out - ref))))

    print("KERNEL_OK")
</pallas_src>

<mosaic_0001>
module attributes {stable_mosaic.version = 11 : i64} {
  func.func @_pred_fused_kernel(%arg0: memref<64x16xbf16, #tpu.memory_space<vmem>>, %arg1: memref<16x128xbf16, #tpu.memory_space<vmem>>, %arg2: memref<32x128xbf16, #tpu.memory_space<vmem>>, %arg3: memref<1x128xf32, #tpu.memory_space<vmem>>, %arg4: memref<32x128xbf16, #tpu.memory_space<vmem>>, %arg5: memref<32x128xbf16, #tpu.memory_space<vmem>>, %arg6: memref<1x128xf32, #tpu.memory_space<vmem>>, %arg7: memref<32x16xbf16, #tpu.memory_space<vmem>>, %arg8: memref<1x16xf32, #tpu.memory_space<vmem>>, %arg9: memref<8x8xf32, #tpu.memory_space<vmem>>, %arg10: memref<8x16xf32, #tpu.memory_space<vmem>>) attributes {dimension_semantics = [], scalar_prefetch = 0 : i64, scratch_operands = 0 : i64, tpu.core_type = #tpu.core_type<tc>} {
    %c0 = arith.constant 0 : index
    %c0_0 = arith.constant 0 : index
    %0 = vector.load %arg2[%c0, %c0_0] : memref<32x128xbf16, #tpu.memory_space<vmem>>, vector<32x128xbf16>
    %c0_1 = arith.constant 0 : index
    %c0_2 = arith.constant 0 : index
    %1 = vector.load %arg4[%c0_1, %c0_2] : memref<32x128xbf16, #tpu.memory_space<vmem>>, vector<32x128xbf16>
    %c0_3 = arith.constant 0 : index
    %c0_4 = arith.constant 0 : index
    %2 = vector.load %arg5[%c0_3, %c0_4] : memref<32x128xbf16, #tpu.memory_space<vmem>>, vector<32x128xbf16>
    %c0_5 = arith.constant 0 : index
    %c0_6 = arith.constant 0 : index
    %3 = vector.load %arg6[%c0_5, %c0_6] : memref<1x128xf32, #tpu.memory_space<vmem>>, vector<1x128xf32>
    %c0_7 = arith.constant 0 : index
    %c0_8 = arith.constant 0 : index
    %4 = vector.load %arg0[%c0_7, %c0_8] : memref<64x16xbf16, #tpu.memory_space<vmem>>, vector<64x16xbf16>
    %c0_9 = arith.constant 0 : index
    %c0_10 = arith.constant 0 : index
    %5 = vector.load %arg1[%c0_9, %c0_10] : memref<16x128xbf16, #tpu.memory_space<vmem>>, vector<16x128xbf16>
    %cst = arith.constant dense<0.000000e+00> : vector<64x128xf32>
    %6 = tpu.matmul %4, %5, %cst {dimension_numbers = #tpu.dot_dimension_numbers<[1], [0], [0], [1], [0, 0, 1, 1], [], []>} : vector<64x16xbf16>, vector<16x128xbf16>, vector<64x128xf32> -> vector<64x128xf32>
    %c0_11 = arith.constant 0 : index
    %c0_12 = arith.constant 0 : index
    %7 = vector.load %arg3[%c0_11, %c0_12] : memref<1x128xf32, #tpu.memory_space<vmem>>, vector<1x128xf32>
    %8 = vector.broadcast %7 : vector<1x128xf32> to vector<64x128xf32>
    %9 = arith.addf %6, %8 : vector<64x128xf32>
    %10 = vector.extract_strided_slice %9 {offsets = [0, 0], sizes = [8, 128], strides = [1, 1]} : vector<64x128xf32> to vector<8x128xf32>
    %11 = math.tanh %10 : vector<8x128xf32>
    %12 = vector.extract_strided_slice %11 {offsets = [0, 0], sizes = [8, 32], strides = [1, 1]} : vector<8x128xf32> to vector<8x32xf32>
    %cst_13 = arith.constant 5.000000e-01 : f32
    %13 = vector.broadcast %cst_13 : f32 to vector<8x32xf32>
    %14 = arith.mulf %13, %12 : vector<8x32xf32>
    %cst_14 = arith.constant 5.000000e-01 : f32
    %15 = vector.broadcast %cst_14 : f32 to vector<8x32xf32>
    %16 = arith.addf %14, %15 : vector<8x32xf32>
    %17 = vector.extract_strided_slice %11 {offsets = [0, 64], sizes = [8, 32], strides = [1, 1]} : vector<8x128xf32> to vector<8x32xf32>
    %18 = vector.extract_strided_slice %11 {offsets = [0, 96], sizes = [8, 32], strides = [1, 1]} : vector<8x128xf32> to vector<8x32xf32>
    %cst_15 = arith.constant 5.000000e-01 : f32
    %19 = vector.broadcast %cst_15 : f32 to vector<8x32xf32>
    %20 = arith.mulf %19, %18 : vector<8x32xf32>
    %cst_16 = arith.constant 5.000000e-01 : f32
    %21 = vector.broadcast %cst_16 : f32 to vector<8x32xf32>
    %22 = arith.addf %20, %21 : vector<8x32xf32>
    %23 = arith.mulf %16, %17 : vector<8x32xf32>
    %24 = math.tanh %23 : vector<8x32xf32>
    %25 = arith.mulf %22, %24 : vector<8x32xf32>
    %26 = arith.truncf %25 : vector<8x32xf32> to vector<8x32xbf16>
    %cst_17 = arith.constant dense<0.000000e+00> : vector<8x128xf32>
    %27 = tpu.matmul %26, %1, %cst_17 {dimension_numbers = #tpu.dot_dimension_numbers<[1], [0], [0], [1], [0, 0, 1, 1], [], []>} : vector<8x32xbf16>, vector<32x128xbf16>, vector<8x128xf32> -> vector<8x128xf32>
    %28 = vector.broadcast %3 : vector<1x128xf32> to vector<8x128xf32>
    %29 = arith.addf %27, %28 : vector<8x128xf32>
    %30 = math.tanh %29 : vector<8x128xf32>
    %31 = vector.extract_strided_slice %30 {offsets = [0, 0], sizes = [8, 32], strides = [1, 1]} : vector<8x128xf32> to vector<8x32xf32>
    %cst_18 = arith.constant 5.000000e-01 : f32
    %32 = vector.broadcast %cst_18 : f32 to vector<8x32xf32>
    %33 = arith.mulf %32, %31 : vector<8x32xf32>
    %cst_19 = arith.constant 5.000000e-01 : f32
    %34 = vector.broadcast %cst_19 : f32 to vector<8x32xf32>
    %35 = arith.addf %33, %34 : vector<8x32xf32>
    %36 = vector.extract_strided_slice %30 {offsets = [0, 64], sizes = [8, 32], strides = [1, 1]} : vector<8x128xf32> to vector<8x32xf32>
    %37 = vector.extract_strided_slice %30 {offsets = [0, 96], sizes = [8, 32], strides = [1, 1]} : vector<8x128xf32> to vector<8x32xf32>
    %cst_20 = arith.constant 5.000000e-01 : f32
    %38 = vector.broadcast %cst_20 : f32 to vector<8x32xf32>
    %39 = arith.mulf %38, %37 : vector<8x32xf32>
    %cst_21 = arith.constant 5.000000e-01 : f32
    %40 = vector.broadcast %cst_21 : f32 to vector<8x32xf32>
    %41 = arith.addf %39, %40 : vector<8x32xf32>
    %42 = arith.mulf %35, %36 : vector<8x32xf32>
    %43 = math.tanh %42 : vector<8x32xf32>
    %44 = arith.mulf %41, %43 : vector<8x32xf32>
    %45 = vector.extract_strided_slice %9 {offsets = [8, 0], sizes = [8, 128], strides = [1, 1]} : vector<64x128xf32> to vector<8x128xf32>
    %46 = arith.truncf %25 : vector<8x32xf32> to vector<8x32xbf16>
    %cst_22 = arith.constant dense<0.000000e+00> : vector<8x128xf32>
    %47 = tpu.matmul %46, %0, %cst_22 {dimension_numbers = #tpu.dot_dimension_numbers<[1], [0], [0], [1], [0, 0, 1, 1], [], []>} : vector<8x32xbf16>, vector<32x128xbf16>, vector<8x128xf32> -> vector<8x128xf32>
    %48 = arith.addf %45, %47 : vector<8x128xf32>
    %49 = math.tanh %48 : vector<8x128xf32>
    %50 = vector.extract_strided_slice %49 {offsets = [0, 0], sizes = [8, 32], strides = [1, 1]} : vector<8x128xf32> to vector<8x32xf32>
    %cst_23 = arith.constant 5.000000e-01 : f32
    %51 = vector.broadcast %cst_23 : f32 to vector<8x32xf32>
    %52 = arith.mulf %51, %50 : vector<8x32xf32>
    %cst_24 = arith.constant 5.000000e-01 : f32
    %53 = vector.broadcast %cst_24 : f32 to vector<8x32xf32>
    %54 = arith.addf %52, %53 : vector<8x32xf32>
    %55 = vector.extract_strided_slice %49 {offsets = [0, 64], sizes = [8, 32], strides = [1, 1]} : vector<8x128xf32> to vector<8x32xf32>
    %56 = vector.extract_strided_slice %49 {offsets = [0, 96], sizes = [8, 32], strides = [1, 1]} : vector<8x128xf32> to vector<8x32xf32>
    %cst_25 = arith.constant 5.000000e-01 : f32
    %57 = vector.broadcast %cst_25 : f32 to vector<8x32xf32>
    %58 = arith.mulf %57, %56 : vector<8x32xf32>
    %cst_26 = arith.constant 5.000000e-01 : f32
    %59 = vector.broadcast %cst_26 : f32 to vector<8x32xf32>
    %60 = arith.addf %58, %59 : vector<8x32xf32>
    %61 = vector.extract_strided_slice %49 {offsets = [0, 32], sizes = [8, 32], strides = [1, 1]} : vector<8x128xf32> to vector<8x32xf32>
    %cst_27 = arith.constant 5.000000e-01 : f32
    %62 = vector.broadcast %cst_27 : f32 to vector<8x32xf32>
    %63 = arith.mulf %62, %61 : vector<8x32xf32>
    %cst_28 = arith.constant 5.000000e-01 : f32
    %64 = vector.broadcast %cst_28 : f32 to vector<8x32xf32>
    %65 = arith.addf %63, %64 : vector<8x32xf32>
    %66 = arith.mulf %65, %23 : vector<8x32xf32>
    %67 = arith.mulf %54, %55 : vector<8x32xf32>
    %68 = arith.addf %66, %67 : vector<8x32xf32>
    %69 = math.tanh %68 : vector<8x32xf32>
    %70 = arith.mulf %60, %69 : vector<8x32xf32>
    %71 = arith.truncf %70 : vector<8x32xf32> to vector<8x32xbf16>
    %cst_29 = arith.constant dense<0.000000e+00> : vector<8x128xf32>
    %72 = tpu.matmul %71, %1, %cst_29 {dimension_numbers = #tpu.dot_dimension_numbers<[1], [0], [0], [1], [0, 0, 1, 1], [], []>} : vector<8x32xbf16>, vector<32x128xbf16>, vector<8x128xf32> -> vector<8x128xf32>
    %73 = arith.truncf %44 : vector<8x32xf32> to vector<8x32xbf16>
    %cst_30 = arith.constant dense<0.000000e+00> : vector<8x128xf32>
    %74 = tpu.matmul %73, %2, %cst_30 {dimension_numbers = #tpu.dot_dimension_numbers<[1], [0], [0], [1], [0, 0, 1, 1], [], []>} : vector<8x32xbf16>, vector<32x128xbf16>, vector<8x128xf32> -> vector<8x128xf32>
    %75 = arith.addf %72, %74 : vector<8x128xf32>
    %76 = vector.broadcast %3 : vector<1x128xf32> to vector<8x128xf32>
    %77 = arith.addf %75, %76 : vector<8x128xf32>
    %78 = math.tanh %77 : vector<8x128xf32>
    %79 = vector.extract_strided_slice %78 {offsets = [0, 0], sizes = [8, 32], strides = [1, 1]} : vector<8x128xf32> to vector<8x32xf32>
    %cst_31 = arith.constant 5.000000e-01 : f32
    %80 = vector.broadcast %cst_31 : f32 to vector<8x32xf32>
    %81 = arith.mulf %80, %79 : vector<8x32xf32>
    %cst_32 = arith.constant 5.000000e-01 : f32
    %82 = vector.broadcast %cst_32 : f32 to vector<8x32xf32>
    %83 = arith.addf %81, %82 : vector<8x32xf32>
    %84 = vector.extract_strided_slice %78 {offsets = [0, 64], sizes = [8, 32], strides = [1, 1]} : vector<8x128xf32> to vector<8x32xf32>
    %85 = vector.extract_strided_slice %78 {offsets = [0, 96], sizes = [8, 32], strides = [1, 1]} : vector<8x128xf32> to vector<8x32xf32>
    %cst_33 = arith.constant 5.000000e-01 : f32
    %86 = vector.broadcast %cst_33 : f32 to vector<8x32xf32>
    %87 = arith.mulf %86, %85 : vector<8x32xf32>
    %cst_34 = arith.constant 5.000000e-01 : f32
    %88 = vector.broadcast %cst_34 : f32 to vector<8x32xf32>
    %89 = arith.addf %87, %88 : vector<8x32xf32>
    %90 = vector.extract_strided_slice %78 {offsets = [0, 32], sizes = [8, 32], strides = [1, 1]} : vector<8x128xf32> to vector<8x32xf32>
    %cst_35 = arith.constant 5.000000e-01 : f32
    %91 = vector.broadcast %cst_35 : f32 to vector<8x32xf32>
    %92 = arith.mulf %91, %90 : vector<8x32xf32>
    %cst_36 = arith.constant 5.000000e-01 : f32
    %93 = vector.broadcast %cst_36 : f32 to vector<8x32xf32>
    %94 = arith.addf %92, %93 : vector<8x32xf32>
    %95 = arith.mulf %94, %42 : vector<8x32xf32>
    %96 = arith.mulf %83, %84 : vector<8x32xf32>
    %97 = arith.addf %95, %96 : vector<8x32xf32>
    %98 = math.tanh %97 : vector<8x32xf32>
    %99 = arith.mulf %89, %98 : vector<8x32xf32>
    %100 = vector.extract_strided_slice %9 {offsets = [16, 0], sizes = [8, 128], strides = [1, 1]} : vector<64x128xf32> to vector<8x128xf32>
    %101 = arith.truncf %70 : vector<8x32xf32> to vector<8x32xbf16>
    %cst_37 = arith.constant dense<0.000000e+00> : vector<8x128xf32>
    %102 = tpu.matmul %101, %0, %cst_37 {dimension_numbers = #tpu.dot_dimension_numbers<[1], [0], [0], [1], [0, 0, 1, 1], [], []>} : vector<8x32xbf16>, vector<32x128xbf16>, vector<8x128xf32> -> vector<8x128xf32>
    %103 = arith.addf %100, %102 : vector<8x128xf32>
    %104 = math.tanh %103 : vector<8x128xf32>
    %105 = vector.extract_strided_slice %104 {offsets = [0, 0], sizes = [8, 32], strides = [1, 1]} : vector<8x128xf32> to vector<8x32xf32>
    %cst_38 = arith.constant 5.000000e-01 : f32
    %106 = vector.broadcast %cst_38 : f32 to vector<8x32xf32>
    %107 = arith.mulf %106, %105 : vector<8x32xf32>
    %cst_39 = arith.constant 5.000000e-01 : f32
    %108 = vector.broadcast %cst_39 : f32 to vector<8x32xf32>
    %109 = arith.addf %107, %108 : vector<8x32xf32>
    %110 = vector.extract_strided_slice %104 {offsets = [0, 64], sizes = [8, 32], strides = [1, 1]} : vector<8x128xf32> to vector<8x32xf32>
    %111 = vector.extract_strided_slice %104 {offsets = [0, 96], sizes = [8, 32], strides = [1, 1]} : vector<8x128xf32> to vector<8x32xf32>
    %cst_40 = arith.constant 5.000000e-01 : f32
    %112 = vector.broadcast %cst_40 : f32 to vector<8x32xf32>
    %113 = arith.mulf %112, %111 : vector<8x32xf32>
    %cst_41 = arith.constant 5.000000e-01 : f32
    %114 = vector.broadcast %cst_41 : f32 to vector<8x32xf32>
    %115 = arith.addf %113, %114 : vector<8x32xf32>
    %116 = vector.extract_strided_slice %104 {offsets = [0, 32], sizes = [8, 32], strides = [1, 1]} : vector<8x128xf32> to vector<8x32xf32>
    %cst_42 = arith.constant 5.000000e-01 : f32
    %117 = vector.broadcast %cst_42 : f32 to vector<8x32xf32>
    %118 = arith.mulf %117, %116 : vector<8x32xf32>
    %cst_43 = arith.constant 5.000000e-01 : f32
    %119 = vector.broadcast %cst_43 : f32 to vector<8x32xf32>
    %120 = arith.addf %118, %119 : vector<8x32xf32>
    %121 = arith.mulf %120, %68 : vector<8x32xf32>
    %122 = arith.mulf %109, %110 : vector<8x32xf32>
    %123 = arith.addf %121, %122 : vector<8x32xf32>
    %124 = math.tanh %123 : vector<8x32xf32>
    %125 = arith.mulf %115, %124 : vector<8x32xf32>
    %126 = arith.truncf %125 : vector<8x32xf32> to vector<8x32xbf16>
    %cst_44 = arith.constant dense<0.000000e+00> : vector<8x128xf32>
    %127 = tpu.matmul %126, %1, %cst_44 {dimension_numbers = #tpu.dot_dimension_numbers<[1], [0], [0], [1], [0, 0, 1, 1], [], []>} : vector<8x32xbf16>, vector<32x128xbf16>, vector<8x128xf32> -> vector<8x128xf32>
    %128 = arith.truncf %99 : vector<8x32xf32> to vector<8x32xbf16>
    %cst_45 = arith.constant dense<0.000000e+00> : vector<8x128xf32>
    %129 = tpu.matmul %128, %2, %cst_45 {dimension_numbers = #tpu.dot_dimension_numbers<[1], [0], [0], [1], [0, 0, 1, 1], [], []>} : vector<8x32xbf16>, vector<32x128xbf16>, vector<8x128xf32> -> vector<8x128xf32>
    %130 = arith.addf %127, %129 : vector<8x128xf32>
    %131 = vector.broadcast %3 : vector<1x128xf32> to vector<8x128xf32>
    %132 = arith.addf %130, %131 : vector<8x128xf32>
    %133 = math.tanh %132 : vector<8x128xf32>
    %134 = vector.extract_strided_slice %133 {offsets = [0, 0], sizes = [8, 32], strides = [1, 1]} : vector<8x128xf32> to vector<8x32xf32>
    %cst_46 = arith.constant 5.000000e-01 : f32
    %135 = vector.broadcast %cst_46 : f32 to vector<8x32xf32>
    %136 = arith.mulf %135, %134 : vector<8x32xf32>
    %cst_47 = arith.constant 5.000000e-01 : f32
    %137 = vector.broadcast %cst_47 : f32 to vector<8x32xf32>
    %138 = arith.addf %136, %137 : vector<8x32xf32>
    %139 = vector.extract_strided_slice %133 {offsets = [0, 64], sizes = [8, 32], strides = [1, 1]} : vector<8x128xf32> to vector<8x32xf32>
    %140 = vector.extract_strided_slice %133 {offsets = [0, 96], sizes = [8, 32], strides = [1, 1]} : vector<8x128xf32> to vector<8x32xf32>
    %cst_48 = arith.constant 5.000000e-01 : f32
    %141 = vector.broadcast %cst_48 : f32 to vector<8x32xf32>
    %142 = arith.mulf %141, %140 : vector<8x32xf32>
    %cst_49 = arith.constant 5.000000e-01 : f32
    %143 = vector.broadcast %cst_49 : f32 to vector<8x32xf32>
    %144 = arith.addf %142, %143 : vector<8x32xf32>
    %145 = vector.extract_strided_slice %133 {offsets = [0, 32], sizes = [8, 32], strides = [1, 1]} : vector<8x128xf32> to vector<8x32xf32>
    %cst_50 = arith.constant 5.000000e-01 : f32
    %146 = vector.broadcast %cst_50 : f32 to vector<8x32xf32>
    %147 = arith.mulf %146, %145 : vector<8x32xf32>
    %cst_51 = arith.constant 5.000000e-01 : f32
    %148 = vector.broadcast %cst_51 : f32 to vector<8x32xf32>
    %149 = arith.addf %147, %148 : vector<8x32xf32>
    %150 = arith.mulf %149, %97 : vector<8x32xf32>
    %151 = arith.mulf %138, %139 : vector<8x32xf32>
    %152 = arith.addf %150, %151 : vector<8x32xf32>
    %153 = math.tanh %152 : vector<8x32xf32>
    %154 = arith.mulf %144, %153 : vector<8x32xf32>
    %155 = vector.extract_strided_slice %9 {offsets = [24, 0], sizes = [8, 128], strides = [1, 1]} : vector<64x128xf32> to vector<8x128xf32>
    %156 = arith.truncf %125 : vector<8x32xf32> to vector<8x32xbf16>
    %cst_52 = arith.constant dense<0.000000e+00> : vector<8x128xf32>
    %157 = tpu.matmul %156, %0, %cst_52 {dimension_numbers = #tpu.dot_dimension_numbers<[1], [0], [0], [1], [0, 0, 1, 1], [], []>} : vector<8x32xbf16>, vector<32x128xbf16>, vector<8x128xf32> -> vector<8x128xf32>
    %158 = arith.addf %155, %157 : vector<8x128xf32>
    %159 = math.tanh %158 : vector<8x128xf32>
    %160 = vector.extract_strided_slice %159 {offsets = [0, 0], sizes = [8, 32], strides = [1, 1]} : vector<8x128xf32> to vector<8x32xf32>
    %cst_53 = arith.constant 5.000000e-01 : f32
    %161 = vector.broadcast %cst_53 : f32 to vector<8x32xf32>
    %162 = arith.mulf %161, %160 : vector<8x32xf32>
    %cst_54 = arith.constant 5.000000e-01 : f32
    %163 = vector.broadcast %cst_54 : f32 to vector<8x32xf32>
    %164 = arith.addf %162, %163 : vector<8x32xf32>
    %165 = vector.extract_strided_slice %159 {offsets = [0, 64], sizes = [8, 32], strides = [1, 1]} : vector<8x128xf32> to vector<8x32xf32>
    %166 = vector.extract_strided_slice %159 {offsets = [0, 96], sizes = [8, 32], strides = [1, 1]} : vector<8x128xf32> to vector<8x32xf32>
    %cst_55 = arith.constant 5.000000e-01 : f32
    %167 = vector.broadcast %cst_55 : f32 to vector<8x32xf32>
    %168 = arith.mulf %167, %166 : vector<8x32xf32>
    %cst_56 = arith.constant 5.000000e-01 : f32
    %169 = vector.broadcast %cst_56 : f32 to vector<8x32xf32>
    %170 = arith.addf %168, %169 : vector<8x32xf32>
    %171 = vector.extract_strided_slice %159 {offsets = [0, 32], sizes = [8, 32], strides = [1, 1]} : vector<8x128xf32> to vector<8x32xf32>
    %cst_57 = arith.constant 5.000000e-01 : f32
    %172 = vector.broadcast %cst_57 : f32 to vector<8x32xf32>
    %173 = arith.mulf %172, %171 : vector<8x32xf32>
    %cst_58 = arith.constant 5.000000e-01 : f32
    %174 = vector.broadcast %cst_58 : f32 to vector<8x32xf32>
    %175 = arith.addf %173, %174 : vector<8x32xf32>
    %176 = arith.mulf %175, %123 : vector<8x32xf32>
    %177 = arith.mulf %164, %165 : vector<8x32xf32>
    %178 = arith.addf %176, %177 : vector<8x32xf32>
    %179 = math.tanh %178 : vector<8x32xf32>
    %180 = arith.mulf %170, %179 : vector<8x32xf32>
    %181 = arith.truncf %180 : vector<8x32xf32> to vector<8x32xbf16>
    %cst_59 = arith.constant dense<0.000000e+00> : vector<8x128xf32>
    %182 = tpu.matmul %181, %1, %cst_59 {dimension_numbers = #tpu.dot_dimension_numbers<[1], [0], [0], [1], [0, 0, 1, 1], [], []>} : vector<8x32xbf16>, vector<32x128xbf16>, vector<8x128xf32> -> vector<8x128xf32>
    %183 = arith.truncf %154 : vector<8x32xf32> to vector<8x32xbf16>
    %cst_60 = arith.constant dense<0.000000e+00> : vector<8x128xf32>
    %184 = tpu.matmul %183, %2, %cst_60 {dimension_numbers = #tpu.dot_dimension_numbers<[1], [0], [0], [1], [0, 0, 1, 1], [], []>} : vector<8x32xbf16>, vector<32x128xbf16>, vector<8x128xf32> -> vector<8x128xf32>
    %185 = arith.addf %182, %184 : vector<8x128xf32>
    %186 = vector.broadcast %3 : vector<1x128xf32> to vector<8x128xf32>
    %187 = arith.addf %185, %186 : vector<8x128xf32>
    %188 = math.tanh %187 : vector<8x128xf32>
    %189 = vector.extract_strided_slice %188 {offsets = [0, 0], sizes = [8, 32], strides = [1, 1]} : vector<8x128xf32> to vector<8x32xf32>
    %cst_61 = arith.constant 5.000000e-01 : f32
    %190 = vector.broadcast %cst_61 : f32 to vector<8x32xf32>
    %191 = arith.mulf %190, %189 : vector<8x32xf32>
    %cst_62 = arith.constant 5.000000e-01 : f32
    %192 = vector.broadcast %cst_62 : f32 to vector<8x32xf32>
    %193 = arith.addf %191, %192 : vector<8x32xf32>
    %194 = vector.extract_strided_slice %188 {offsets = [0, 64], sizes = [8, 32], strides = [1, 1]} : vector<8x128xf32> to vector<8x32xf32>
    %195 = vector.extract_strided_slice %188 {offsets = [0, 96], sizes = [8, 32], strides = [1, 1]} : vector<8x128xf32> to vector<8x32xf32>
    %cst_63 = arith.constant 5.000000e-01 : f32
    %196 = vector.broadcast %cst_63 : f32 to vector<8x32xf32>
    %197 = arith.mulf %196, %195 : vector<8x32xf32>
    %cst_64 = arith.constant 5.000000e-01 : f32
    %198 = vector.broadcast %cst_64 : f32 to vector<8x32xf32>
    %199 = arith.addf %197, %198 : vector<8x32xf32>
    %200 = vector.extract_strided_slice %188 {offsets = [0, 32], sizes = [8, 32], strides = [1, 1]} : vector<8x128xf32> to vector<8x32xf32>
    %cst_65 = arith.constant 5.000000e-01 : f32
    %201 = vector.broadcast %cst_65 : f32 to vector<8x32xf32>
    %202 = arith.mulf %201, %200 : vector<8x32xf32>
    %cst_66 = arith.constant 5.000000e-01 : f32
    %203 = vector.broadcast %cst_66 : f32 to vector<8x32xf32>
    %204 = arith.addf %202, %203 : vector<8x32xf32>
    %205 = arith.mulf %204, %152 : vector<8x32xf32>
    %206 = arith.mulf %193, %194 : vector<8x32xf32>
    %207 = arith.addf %205, %206 : vector<8x32xf32>
    %208 = math.tanh %207 : vector<8x32xf32>
    %209 = arith.mulf %199, %208 : vector<8x32xf32>
    %210 = vector.extract_strided_slice %9 {offsets = [32, 0], sizes = [8, 128], strides = [1, 1]} : vector<64x128xf32> to vector<8x128xf32>
    %211 = arith.truncf %180 : vector<8x32xf32> to vector<8x32xbf16>
    %cst_67 = arith.constant dense<0.000000e+00> : vector<8x128xf32>
    %212 = tpu.matmul %211, %0, %cst_67 {dimension_numbers = #tpu.dot_dimension_numbers<[1], [0], [0], [1], [0, 0, 1, 1], [], []>} : vector<8x32xbf16>, vector<32x128xbf16>, vector<8x128xf32> -> vector<8x128xf32>
    %213 = arith.addf %210, %212 : vector<8x128xf32>
    %214 = math.tanh %213 : vector<8x128xf32>
    %215 = vector.extract_strided_slice %214 {offsets = [0, 0], sizes = [8, 32], strides = [1, 1]} : vector<8x128xf32> to vector<8x32xf32>
    %cst_68 = arith.constant 5.000000e-01 : f32
    %216 = vector.broadcast %cst_68 : f32 to vector<8x32xf32>
    %217 = arith.mulf %216, %215 : vector<8x32xf32>
    %cst_69 = arith.constant 5.000000e-01 : f32
    %218 = vector.broadcast %cst_69 : f32 to vector<8x32xf32>
    %219 = arith.addf %217, %218 : vector<8x32xf32>
    %220 = vector.extract_strided_slice %214 {offsets = [0, 64], sizes = [8, 32], strides = [1, 1]} : vector<8x128xf32> to vector<8x32xf32>
    %221 = vector.extract_strided_slice %214 {offsets = [0, 96], sizes = [8, 32], strides = [1, 1]} : vector<8x128xf32> to vector<8x32xf32>
    %cst_70 = arith.constant 5.000000e-01 : f32
    %222 = vector.broadcast %cst_70 : f32 to vector<8x32xf32>
    %223 = arith.mulf %222, %221 : vector<8x32xf32>
    %cst_71 = arith.constant 5.000000e-01 : f32
    %224 = vector.broadcast %cst_71 : f32 to vector<8x32xf32>
    %225 = arith.addf %223, %224 : vector<8x32xf32>
    %226 = vector.extract_strided_slice %214 {offsets = [0, 32], sizes = [8, 32], strides = [1, 1]} : vector<8x128xf32> to vector<8x32xf32>
    %cst_72 = arith.constant 5.000000e-01 : f32
    %227 = vector.broadcast %cst_72 : f32 to vector<8x32xf32>
    %228 = arith.mulf %227, %226 : vector<8x32xf32>
    %cst_73 = arith.constant 5.000000e-01 : f32
    %229 = vector.broadcast %cst_73 : f32 to vector<8x32xf32>
    %230 = arith.addf %228, %229 : vector<8x32xf32>
    %231 = arith.mulf %230, %178 : vector<8x32xf32>
    %232 = arith.mulf %219, %220 : vector<8x32xf32>
    %233 = arith.addf %231, %232 : vector<8x32xf32>
    %234 = math.tanh %233 : vector<8x32xf32>
    %235 = arith.mulf %225, %234 : vector<8x32xf32>
    %236 = arith.truncf %235 : vector<8x32xf32> to vector<8x32xbf16>
    %cst_74 = arith.constant dense<0.000000e+00> : vector<8x128xf32>
    %237 = tpu.matmul %236, %1, %cst_74 {dimension_numbers = #tpu.dot_dimension_numbers<[1], [0], [0], [1], [0, 0, 1, 1], [], []>} : vector<8x32xbf16>, vector<32x128xbf16>, vector<8x128xf32> -> vector<8x128xf32>
    %238 = arith.truncf %209 : vector<8x32xf32> to vector<8x32xbf16>
    %cst_75 = arith.constant dense<0.000000e+00> : vector<8x128xf32>
    %239 = tpu.matmul %238, %2, %cst_75 {dimension_numbers = #tpu.dot_dimension_numbers<[1], [0], [0], [1], [0, 0, 1, 1], [], []>} : vector<8x32xbf16>, vector<32x128xbf16>, vector<8x128xf32> -> vector<8x128xf32>
    %240 = arith.addf %237, %239 : vector<8x128xf32>
    %241 = vector.broadcast %3 : vector<1x128xf32> to vector<8x128xf32>
    %242 = arith.addf %240, %241 : vector<8x128xf32>
    %243 = math.tanh %242 : vector<8x128xf32>
    %244 = vector.extract_strided_slice %243 {offsets = [0, 0], sizes = [8, 32], strides = [1, 1]} : vector<8x128xf32> to vector<8x32xf32>
    %cst_76 = arith.constant 5.000000e-01 : f32
    %245 = vector.broadcast %cst_76 : f32 to vector<8x32xf32>
    %246 = arith.mulf %245, %244 : vector<8x32xf32>
    %cst_77 = arith.constant 5.000000e-01 : f32
    %247 = vector.broadcast %cst_77 : f32 to vector<8x32xf32>
    %248 = arith.addf %246, %247 : vector<8x32xf32>
    %249 = vector.extract_strided_slice %243 {offsets = [0, 64], sizes = [8, 32], strides = [1, 1]} : vector<8x128xf32> to vector<8x32xf32>
    %250 = vector.extract_strided_slice %243 {offsets = [0, 96], sizes = [8, 32], strides = [1, 1]} : vector<8x128xf32> to vector<8x32xf32>
    %cst_78 = arith.constant 5.000000e-01 : f32
    %251 = vector.broadcast %cst_78 : f32 to vector<8x32xf32>
    %252 = arith.mulf %251, %250 : vector<8x32xf32>
    %cst_79 = arith.constant 5.000000e-01 : f32
    %253 = vector.broadcast %cst_79 : f32 to vector<8x32xf32>
    %254 = arith.addf %252, %253 : vector<8x32xf32>
    %255 = vector.extract_strided_slice %243 {offsets = [0, 32], sizes = [8, 32], strides = [1, 1]} : vector<8x128xf32> to vector<8x32xf32>
    %cst_80 = arith.constant 5.000000e-01 : f32
    %256 = vector.broadcast %cst_80 : f32 to vector<8x32xf32>
    %257 = arith.mulf %256, %255 : vector<8x32xf32>
    %cst_81 = arith.constant 5.000000e-01 : f32
    %258 = vector.broadcast %cst_81 : f32 to vector<8x32xf32>
    %259 = arith.addf %257, %258 : vector<8x32xf32>
    %260 = arith.mulf %259, %207 : vector<8x32xf32>
    %261 = arith.mulf %248, %249 : vector<8x32xf32>
    %262 = arith.addf %260, %261 : vector<8x32xf32>
    %263 = math.tanh %262 : vector<8x32xf32>
    %264 = arith.mulf %254, %263 : vector<8x32xf32>
    %265 = vector.extract_strided_slice %9 {offsets = [40, 0], sizes = [8, 128], strides = [1, 1]} : vector<64x128xf32> to vector<8x128xf32>
    %266 = arith.truncf %235 : vector<8x32xf32> to vector<8x32xbf16>
    %cst_82 = arith.constant dense<0.000000e+00> : vector<8x128xf32>
    %267 = tpu.matmul %266, %0, %cst_82 {dimension_numbers = #tpu.dot_dimension_numbers<[1], [0], [0], [1], [0, 0, 1, 1], [], []>} : vector<8x32xbf16>, vector<32x128xbf16>, vector<8x128xf32> -> vector<8x128xf32>
    %268 = arith.addf %265, %267 : vector<8x128xf32>
    %269 = math.tanh %268 : vector<8x128xf32>
    %270 = vector.extract_strided_slice %269 {offsets = [0, 0], sizes = [8, 32], strides = [1, 1]} : vector<8x128xf32> to vector<8x32xf32>
    %cst_83 = arith.constant 5.000000e-01 : f32
    %271 = vector.broadcast %cst_83 : f32 to vector<8x32xf32>
    %272 = arith.mulf %271, %270 : vector<8x32xf32>
    %cst_84 = arith.constant 5.000000e-01 : f32
    %273 = vector.broadcast %cst_84 : f32 to vector<8x32xf32>
    %274 = arith.addf %272, %273 : vector<8x32xf32>
    %275 = vector.extract_strided_slice %269 {offsets = [0, 64], sizes = [8, 32], strides = [1, 1]} : vector<8x128xf32> to vector<8x32xf32>
    %276 = vector.extract_strided_slice %269 {offsets = [0, 96], sizes = [8, 32], strides = [1, 1]} : vector<8x128xf32> to vector<8x32xf32>
    %cst_85 = arith.constant 5.000000e-01 : f32
    %277 = vector.broadcast %cst_85 : f32 to vector<8x32xf32>
    %278 = arith.mulf %277, %276 : vector<8x32xf32>
    %cst_86 = arith.constant 5.000000e-01 : f32
    %279 = vector.broadcast %cst_86 : f32 to vector<8x32xf32>
    %280 = arith.addf %278, %279 : vector<8x32xf32>
    %281 = vector.extract_strided_slice %269 {offsets = [0, 32], sizes = [8, 32], strides = [1, 1]} : vector<8x128xf32> to vector<8x32xf32>
    %cst_87 = arith.constant 5.000000e-01 : f32
    %282 = vector.broadcast %cst_87 : f32 to vector<8x32xf32>
    %283 = arith.mulf %282, %281 : vector<8x32xf32>
    %cst_88 = arith.constant 5.000000e-01 : f32
    %284 = vector.broadcast %cst_88 : f32 to vector<8x32xf32>
    %285 = arith.addf %283, %284 : vector<8x32xf32>
    %286 = arith.mulf %285, %233 : vector<8x32xf32>
    %287 = arith.mulf %274, %275 : vector<8x32xf32>
    %288 = arith.addf %286, %287 : vector<8x32xf32>
    %289 = math.tanh %288 : vector<8x32xf32>
    %290 = arith.mulf %280, %289 : vector<8x32xf32>
    %291 = arith.truncf %290 : vector<8x32xf32> to vector<8x32xbf16>
    %cst_89 = arith.constant dense<0.000000e+00> : vector<8x128xf32>
    %292 = tpu.matmul %291, %1, %cst_89 {dimension_numbers = #tpu.dot_dimension_numbers<[1], [0], [0], [1], [0, 0, 1, 1], [], []>} : vector<8x32xbf16>, vector<32x128xbf16>, vector<8x128xf32> -> vector<8x128xf32>
    %293 = arith.truncf %264 : vector<8x32xf32> to vector<8x32xbf16>
    %cst_90 = arith.constant dense<0.000000e+00> : vector<8x128xf32>
    %294 = tpu.matmul %293, %2, %cst_90 {dimension_numbers = #tpu.dot_dimension_numbers<[1], [0], [0], [1], [0, 0, 1, 1], [], []>} : vector<8x32xbf16>, vector<32x128xbf16>, vector<8x128xf32> -> vector<8x128xf32>
    %295 = arith.addf %292, %294 : vector<8x128xf32>
    %296 = vector.broadcast %3 : vector<1x128xf32> to vector<8x128xf32>
    %297 = arith.addf %295, %296 : vector<8x128xf32>
    %298 = math.tanh %297 : vector<8x128xf32>
    %299 = vector.extract_strided_slice %298 {offsets = [0, 0], sizes = [8, 32], strides = [1, 1]} : vector<8x128xf32> to vector<8x32xf32>
    %cst_91 = arith.constant 5.000000e-01 : f32
    %300 = vector.broadcast %cst_91 : f32 to vector<8x32xf32>
    %301 = arith.mulf %300, %299 : vector<8x32xf32>
    %cst_92 = arith.constant 5.000000e-01 : f32
    %302 = vector.broadcast %cst_92 : f32 to vector<8x32xf32>
    %303 = arith.addf %301, %302 : vector<8x32xf32>
    %304 = vector.extract_strided_slice %298 {offsets = [0, 64], sizes = [8, 32], strides = [1, 1]} : vector<8x128xf32> to vector<8x32xf32>
    %305 = vector.extract_strided_slice %298 {offsets = [0, 96], sizes = [8, 32], strides = [1, 1]} : vector<8x128xf32> to vector<8x32xf32>
    %cst_93 = arith.constant 5.000000e-01 : f32
    %306 = vector.broadcast %cst_93 : f32 to vector<8x32xf32>
    %307 = arith.mulf %306, %305 : vector<8x32xf32>
    %cst_94 = arith.constant 5.000000e-01 : f32
    %308 = vector.broadcast %cst_94 : f32 to vector<8x32xf32>
    %309 = arith.addf %307, %308 : vector<8x32xf32>
    %310 = vector.extract_strided_slice %298 {offsets = [0, 32], sizes = [8, 32], strides = [1, 1]} : vector<8x128xf32> to vector<8x32xf32>
    %cst_95 = arith.constant 5.000000e-01 : f32
    %311 = vector.broadcast %cst_95 : f32 to vector<8x32xf32>
    %312 = arith.mulf %311, %310 : vector<8x32xf32>
    %cst_96 = arith.constant 5.000000e-01 : f32
    %313 = vector.broadcast %cst_96 : f32 to vector<8x32xf32>
    %314 = arith.addf %312, %313 : vector<8x32xf32>
    %315 = arith.mulf %314, %262 : vector<8x32xf32>
    %316 = arith.mulf %303, %304 : vector<8x32xf32>
    %317 = arith.addf %315, %316 : vector<8x32xf32>
    %318 = math.tanh %317 : vector<8x32xf32>
    %319 = arith.mulf %309, %318 : vector<8x32xf32>
    %320 = vector.extract_strided_slice %9 {offsets = [48, 0], sizes = [8, 128], strides = [1, 1]} : vector<64x128xf32> to vector<8x128xf32>
    %321 = arith.truncf %290 : vector<8x32xf32> to vector<8x32xbf16>
    %cst_97 = arith.constant dense<0.000000e+00> : vector<8x128xf32>
    %322 = tpu.matmul %321, %0, %cst_97 {dimension_numbers = #tpu.dot_dimension_numbers<[1], [0], [0], [1], [0, 0, 1, 1], [], []>} : vector<8x32xbf16>, vector<32x128xbf16>, vector<8x128xf32> -> vector<8x128xf32>
    %323 = arith.addf %320, %322 : vector<8x128xf32>
    %324 = math.tanh %323 : vector<8x128xf32>
    %325 = vector.extract_strided_slice %324 {offsets = [0, 0], sizes = [8, 32], strides = [1, 1]} : vector<8x128xf32> to vector<8x32xf32>
    %cst_98 = arith.constant 5.000000e-01 : f32
    %326 = vector.broadcast %cst_98 : f32 to vector<8x32xf32>
    %327 = arith.mulf %326, %325 : vector<8x32xf32>
    %cst_99 = arith.constant 5.000000e-01 : f32
    %328 = vector.broadcast %cst_99 : f32 to vector<8x32xf32>
    %329 = arith.addf %327, %328 : vector<8x32xf32>
    %330 = vector.extract_strided_slice %324 {offsets = [0, 64], sizes = [8, 32], strides = [1, 1]} : vector<8x128xf32> to vector<8x32xf32>
    %331 = vector.extract_strided_slice %324 {offsets = [0, 96], sizes = [8, 32], strides = [1, 1]} : vector<8x128xf32> to vector<8x32xf32>
    %cst_100 = arith.constant 5.000000e-01 : f32
    %332 = vector.broadcast %cst_100 : f32 to vector<8x32xf32>
    %333 = arith.mulf %332, %331 : vector<8x32xf32>
    %cst_101 = arith.constant 5.000000e-01 : f32
    %334 = vector.broadcast %cst_101 : f32 to vector<8x32xf32>
    %335 = arith.addf %333, %334 : vector<8x32xf32>
    %336 = vector.extract_strided_slice %324 {offsets = [0, 32], sizes = [8, 32], strides = [1, 1]} : vector<8x128xf32> to vector<8x32xf32>
    %cst_102 = arith.constant 5.000000e-01 : f32
    %337 = vector.broadcast %cst_102 : f32 to vector<8x32xf32>
    %338 = arith.mulf %337, %336 : vector<8x32xf32>
    %cst_103 = arith.constant 5.000000e-01 : f32
    %339 = vector.broadcast %cst_103 : f32 to vector<8x32xf32>
    %340 = arith.addf %338, %339 : vector<8x32xf32>
    %341 = arith.mulf %340, %288 : vector<8x32xf32>
    %342 = arith.mulf %329, %330 : vector<8x32xf32>
    %343 = arith.addf %341, %342 : vector<8x32xf32>
    %344 = math.tanh %343 : vector<8x32xf32>
    %345 = arith.mulf %335, %344 : vector<8x32xf32>
    %346 = arith.truncf %345 : vector<8x32xf32> to vector<8x32xbf16>
    %cst_104 = arith.constant dense<0.000000e+00> : vector<8x128xf32>
    %347 = tpu.matmul %346, %1, %cst_104 {dimension_numbers = #tpu.dot_dimension_numbers<[1], [0], [0], [1], [0, 0, 1, 1], [], []>} : vector<8x32xbf16>, vector<32x128xbf16>, vector<8x128xf32> -> vector<8x128xf32>
    %348 = arith.truncf %319 : vector<8x32xf32> to vector<8x32xbf16>
    %cst_105 = arith.constant dense<0.000000e+00> : vector<8x128xf32>
    %349 = tpu.matmul %348, %2, %cst_105 {dimension_numbers = #tpu.dot_dimension_numbers<[1], [0], [0], [1], [0, 0, 1, 1], [], []>} : vector<8x32xbf16>, vector<32x128xbf16>, vector<8x128xf32> -> vector<8x128xf32>
    %350 = arith.addf %347, %349 : vector<8x128xf32>
    %351 = vector.broadcast %3 : vector<1x128xf32> to vector<8x128xf32>
    %352 = arith.addf %350, %351 : vector<8x128xf32>
    %353 = math.tanh %352 : vector<8x128xf32>
    %354 = vector.extract_strided_slice %353 {offsets = [0, 0], sizes = [8, 32], strides = [1, 1]} : vector<8x128xf32> to vector<8x32xf32>
    %cst_106 = arith.constant 5.000000e-01 : f32
    %355 = vector.broadcast %cst_106 : f32 to vector<8x32xf32>
    %356 = arith.mulf %355, %354 : vector<8x32xf32>
    %cst_107 = arith.constant 5.000000e-01 : f32
    %357 = vector.broadcast %cst_107 : f32 to vector<8x32xf32>
    %358 = arith.addf %356, %357 : vector<8x32xf32>
    %359 = vector.extract_strided_slice %353 {offsets = [0, 64], sizes = [8, 32], strides = [1, 1]} : vector<8x128xf32> to vector<8x32xf32>
    %360 = vector.extract_strided_slice %353 {offsets = [0, 96], sizes = [8, 32], strides = [1, 1]} : vector<8x128xf32> to vector<8x32xf32>
    %cst_108 = arith.constant 5.000000e-01 : f32
    %361 = vector.broadcast %cst_108 : f32 to vector<8x32xf32>
    %362 = arith.mulf %361, %360 : vector<8x32xf32>
    %cst_109 = arith.constant 5.000000e-01 : f32
    %363 = vector.broadcast %cst_109 : f32 to vector<8x32xf32>
    %364 = arith.addf %362, %363 : vector<8x32xf32>
    %365 = vector.extract_strided_slice %353 {offsets = [0, 32], sizes = [8, 32], strides = [1, 1]} : vector<8x128xf32> to vector<8x32xf32>
    %cst_110 = arith.constant 5.000000e-01 : f32
    %366 = vector.broadcast %cst_110 : f32 to vector<8x32xf32>
    %367 = arith.mulf %366, %365 : vector<8x32xf32>
    %cst_111 = arith.constant 5.000000e-01 : f32
    %368 = vector.broadcast %cst_111 : f32 to vector<8x32xf32>
    %369 = arith.addf %367, %368 : vector<8x32xf32>
    %370 = arith.mulf %369, %317 : vector<8x32xf32>
    %371 = arith.mulf %358, %359 : vector<8x32xf32>
    %372 = arith.addf %370, %371 : vector<8x32xf32>
    %373 = math.tanh %372 : vector<8x32xf32>
    %374 = arith.mulf %364, %373 : vector<8x32xf32>
    %375 = vector.extract_strided_slice %9 {offsets = [56, 0], sizes = [8, 128], strides = [1, 1]} : vector<64x128xf32> to vector<8x128xf32>
    %376 = arith.truncf %345 : vector<8x32xf32> to vector<8x32xbf16>
    %cst_112 = arith.constant dense<0.000000e+00> : vector<8x128xf32>
    %377 = tpu.matmul %376, %0, %cst_112 {dimension_numbers = #tpu.dot_dimension_numbers<[1], [0], [0], [1], [0, 0, 1, 1], [], []>} : vector<8x32xbf16>, vector<32x128xbf16>, vector<8x128xf32> -> vector<8x128xf32>
    %378 = arith.addf %375, %377 : vector<8x128xf32>
    %379 = math.tanh %378 : vector<8x128xf32>
    %380 = vector.extract_strided_slice %379 {offsets = [0, 0], sizes = [8, 32], strides = [1, 1]} : vector<8x128xf32> to vector<8x32xf32>
    %cst_113 = arith.constant 5.000000e-01 : f32
    %381 = vector.broadcast %cst_113 : f32 to vector<8x32xf32>
    %382 = arith.mulf %381, %380 : vector<8x32xf32>
    %cst_114 = arith.constant 5.000000e-01 : f32
    %383 = vector.broadcast %cst_114 : f32 to vector<8x32xf32>
    %384 = arith.addf %382, %383 : vector<8x32xf32>
    %385 = vector.extract_strided_slice %379 {offsets = [0, 64], sizes = [8, 32], strides = [1, 1]} : vector<8x128xf32> to vector<8x32xf32>
    %386 = vector.extract_strided_slice %379 {offsets = [0, 96], sizes = [8, 32], strides = [1, 1]} : vector<8x128xf32> to vector<8x32xf32>
    %cst_115 = arith.constant 5.000000e-01 : f32
    %387 = vector.broadcast %cst_115 : f32 to vector<8x32xf32>
    %388 = arith.mulf %387, %386 : vector<8x32xf32>
    %cst_116 = arith.constant 5.000000e-01 : f32
    %389 = vector.broadcast %cst_116 : f32 to vector<8x32xf32>
    %390 = arith.addf %388, %389 : vector<8x32xf32>
    %391 = vector.extract_strided_slice %379 {offsets = [0, 32], sizes = [8, 32], strides = [1, 1]} : vector<8x128xf32> to vector<8x32xf32>
    %cst_117 = arith.constant 5.000000e-01 : f32
    %392 = vector.broadcast %cst_117 : f32 to vector<8x32xf32>
    %393 = arith.mulf %392, %391 : vector<8x32xf32>
    %cst_118 = arith.constant 5.000000e-01 : f32
    %394 = vector.broadcast %cst_118 : f32 to vector<8x32xf32>
    %395 = arith.addf %393, %394 : vector<8x32xf32>
    %396 = arith.mulf %395, %343 : vector<8x32xf32>
    %397 = arith.mulf %384, %385 : vector<8x32xf32>
    %398 = arith.addf %396, %397 : vector<8x32xf32>
    %399 = math.tanh %398 : vector<8x32xf32>
    %400 = arith.mulf %390, %399 : vector<8x32xf32>
    %401 = arith.truncf %400 : vector<8x32xf32> to vector<8x32xbf16>
    %cst_119 = arith.constant dense<0.000000e+00> : vector<8x128xf32>
    %402 = tpu.matmul %401, %1, %cst_119 {dimension_numbers = #tpu.dot_dimension_numbers<[1], [0], [0], [1], [0, 0, 1, 1], [], []>} : vector<8x32xbf16>, vector<32x128xbf16>, vector<8x128xf32> -> vector<8x128xf32>
    %403 = arith.truncf %374 : vector<8x32xf32> to vector<8x32xbf16>
    %cst_120 = arith.constant dense<0.000000e+00> : vector<8x128xf32>
    %404 = tpu.matmul %403, %2, %cst_120 {dimension_numbers = #tpu.dot_dimension_numbers<[1], [0], [0], [1], [0, 0, 1, 1], [], []>} : vector<8x32xbf16>, vector<32x128xbf16>, vector<8x128xf32> -> vector<8x128xf32>
    %405 = arith.addf %402, %404 : vector<8x128xf32>
    %406 = vector.broadcast %3 : vector<1x128xf32> to vector<8x128xf32>
    %407 = arith.addf %405, %406 : vector<8x128xf32>
    %408 = vector.extract_strided_slice %407 {offsets = [0, 96], sizes = [8, 32], strides = [1, 1]} : vector<8x128xf32> to vector<8x32xf32>
    %cst_121 = arith.constant 2.000000e+00 : f32
    %409 = vector.broadcast %cst_121 : f32 to vector<8x32xf32>
    %410 = arith.mulf %409, %408 : vector<8x32xf32>
    %411 = arith.mulf %410, %400 : vector<8x32xf32>
    %412 = arith.addf %374, %411 : vector<8x32xf32>
    %c0_122 = arith.constant 0 : index
    %c0_123 = arith.constant 0 : index
    %413 = vector.load %arg9[%c0_122, %c0_123] : memref<8x8xf32, #tpu.memory_space<vmem>>, vector<8x8xf32>
    %cst_124 = arith.constant dense<0.000000e+00> : vector<8xf32>
    %414 = vector.multi_reduction <add>, %413, %cst_124 [1] : vector<8x8xf32> to vector<8xf32>
    %415 = vector.shape_cast %414 : vector<8xf32> to vector<8x1xf32>
    %cst_125 = arith.constant 8.000000e+00 : f32
    %416 = vector.broadcast %cst_125 : f32 to vector<8x1xf32>
    %417 = arith.divf %415, %416 : vector<8x1xf32>
    %418 = arith.truncf %412 : vector<8x32xf32> to vector<8x32xbf16>
    %c0_126 = arith.constant 0 : index
    %c0_127 = arith.constant 0 : index
    %419 = vector.load %arg7[%c0_126, %c0_127] : memref<32x16xbf16, #tpu.memory_space<vmem>>, vector<32x16xbf16>
    %cst_128 = arith.constant dense<0.000000e+00> : vector<8x16xf32>
    %420 = tpu.matmul %418, %419, %cst_128 {dimension_numbers = #tpu.dot_dimension_numbers<[1], [0], [0], [1], [0, 0, 1, 1], [], []>} : vector<8x32xbf16>, vector<32x16xbf16>, vector<8x16xf32> -> vector<8x16xf32>
    %c0_129 = arith.constant 0 : index
    %c0_130 = arith.constant 0 : index
    %421 = vector.load %arg8[%c0_129, %c0_130] : memref<1x16xf32, #tpu.memory_space<vmem>>, vector<1x16xf32>
    %422 = vector.broadcast %421 : vector<1x16xf32> to vector<8x16xf32>
    %423 = arith.addf %420, %422 : vector<8x16xf32>
    %424 = vector.broadcast %417 : vector<8x1xf32> to vector<8x16xf32>
    %425 = arith.addf %423, %424 : vector<8x16xf32>
    %c0_131 = arith.constant 0 : index
    %c0_132 = arith.constant 0 : index
    %426 = vector.load %arg10[%c0_131, %c0_132] : memref<8x16xf32, #tpu.memory_space<vmem>>, vector<8x16xf32>
    tpu.vector_store %arg10[%c0_131, %c0_132], %425 {strides = array<i32>} : memref<8x16xf32, #tpu.memory_space<vmem>>, vector<8x16xf32>,
    return
  }
}

</mosaic_0001>

<llo_original>
// kernel: pred_forward.1
$region0: #{pred_forward.1}
  #allocation0 [shape = 'u32[]', space=smem, size = 0x4, offset = 0x4, fixed_abs, tag = 'smem constant byte address 0x4 - core index']
  #allocation1 [shape = 'u32[72,128]{1,0:T(1,128)}', space=vmem, size = 0x9000, scoped, tag = 'internal scratch']
  %s0 = inlined_call_operand.vmem [shape: bf16[64,16], index: 0, kind: input, shape index: {}]
  %s1 = inlined_call_operand.vmem [shape: bf16[16,128], index: 1, kind: input, shape index: {}]
  %s2 = inlined_call_operand.vmem [shape: bf16[32,128], index: 2, kind: input, shape index: {}]
  %s3 = inlined_call_operand.vmem [shape: f32[1,128], index: 3, kind: input, shape index: {}]
  %s4 = inlined_call_operand.vmem [shape: bf16[32,128], index: 4, kind: input, shape index: {}]
  %s5 = inlined_call_operand.vmem [shape: bf16[32,128], index: 5, kind: input, shape index: {}]
  %s6 = inlined_call_operand.vmem [shape: f32[1,128], index: 6, kind: input, shape index: {}]
  %s7 = inlined_call_operand.vmem [shape: bf16[32,16], index: 7, kind: input, shape index: {}]
  %s8 = inlined_call_operand.vmem [shape: f32[1,16], index: 8, kind: input, shape index: {}]
  %s9 = inlined_call_operand.vmem [shape: f32[8,8], index: 9, kind: input, shape index: {}]
  %s10 = inlined_call_operand.hbm [shape: f32[8,16], index: 10, kind: output, shape index: {}]
  %s11 = sld [smem:[#allocation0]]
  $region50: #{pred_forward.1} parent=0
    _
  %s13 = ssub.s32 1, %s11
  %s14 = scalar_select 0, %s13, %s11
  $region1: #{pred_forward.1} parent=0
    #allocation2 [shape = 'u8[4096]{0}', space=vmem, size = 0x1000, scoped, tag = 'output window, operand 0, single buffered']
    #allocation3 [shape = 's32[1]{0}', space=sflag, size = 0x4, scoped, tag = 'scoped memory for pred_forward.1']
    %15 = vsyncpa [#allocation3], 0
    // Predicated region
    $region2: #{pred_forward.1} parent=1 // pred_check
      _
    $region3: #{pred_forward.1} parent=1 // pred_check_branch
      %17 = sbr.rel (0) target = $region5
    $region4: #{pred_forward.1} parent=1 // pred_region
      _
    $region5: #{pred_forward.1} parent=1 // pred_fallthru
      _
    // Predicated region
    $region6: #{pred_forward.1} parent=1 // pred_check
      _
    $region7: #{pred_forward.1} parent=1 // pred_check_branch
      %19 = sbr.rel (0) target = $region9
    $region8: #{pred_forward.1} parent=1 // pred_region
      _
    $region9: #{pred_forward.1} parent=1 // pred_fallthru
      _
    // Predicated region
    $region10: #{pred_forward.1} parent=1 // pred_check
      _
    $region11: #{pred_forward.1} parent=1 // pred_check_branch
      %21 = sbr.rel (0) target = $region13
    $region12: #{pred_forward.1} parent=1 // pred_region
      _
    $region13: #{pred_forward.1} parent=1 // pred_fallthru
      _
    // Predicated region
    $region14: #{pred_forward.1} parent=1 // pred_check
      _
    $region15: #{pred_forward.1} parent=1 // pred_check_branch
      %23 = sbr.rel (0) target = $region17
    $region16: #{pred_forward.1} parent=1 // pred_region
      _
    $region17: #{pred_forward.1} parent=1 // pred_fallthru
      _
    // Predicated region
    $region18: #{pred_forward.1} parent=1 // pred_check
      _
    $region19: #{pred_forward.1} parent=1 // pred_check_branch
      %25 = sbr.rel (0) target = $region21
    $region20: #{pred_forward.1} parent=1 // pred_region
      _
    $region21: #{pred_forward.1} parent=1 // pred_fallthru
      _
    // Predicated region
    $region22: #{pred_forward.1} parent=1 // pred_check
      _
    $region23: #{pred_forward.1} parent=1 // pred_check_branch
      %27 = sbr.rel (0) target = $region25
    $region24: #{pred_forward.1} parent=1 // pred_region
      _
    $region25: #{pred_forward.1} parent=1 // pred_fallthru
      _
    // Predicated region
    $region26: #{pred_forward.1} parent=1 // pred_check
      _
    $region27: #{pred_forward.1} parent=1 // pred_check_branch
      %29 = sbr.rel (0) target = $region29
    $region28: #{pred_forward.1} parent=1 // pred_region
      _
    $region29: #{pred_forward.1} parent=1 // pred_fallthru
      _
    // Predicated region
    $region30: #{pred_forward.1} parent=1 // pred_check
      _
    $region31: #{pred_forward.1} parent=1 // pred_check_branch
      %31 = sbr.rel (0) target = $region33
    $region32: #{pred_forward.1} parent=1 // pred_region
      _
    $region33: #{pred_forward.1} parent=1 // pred_fallthru
      _
    // Predicated region
    $region34: #{pred_forward.1} parent=1 // pred_check
      _
    $region35: #{pred_forward.1} parent=1 // pred_check_branch
      %33 = sbr.rel (0) target = $region37
    $region36: #{pred_forward.1} parent=1 // pred_region
      _
    $region37: #{pred_forward.1} parent=1 // pred_fallthru
      _
    // Predicated region
    $region38: #{pred_forward.1} parent=1 // pred_check
      _
    $region39: #{pred_forward.1} parent=1 // pred_check_branch
      %35 = sbr.rel (0) target = $region41
    $region40: #{pred_forward.1} parent=1 // pred_region
      _
    $region41: #{pred_forward.1} parent=1 // pred_fallthru
      _
    %v37 = vld [vmem:[%s2] sm:$0xf]
    %v38 = vld [vmem:[%s2 + $0x4] sm:$0xf]
    %v39 = vld [vmem:[%s2 + $0x8] sm:$0xf]
    %v40 = vld [vmem:[%s2 + $0xc] sm:$0xf]
    %v41 = vld [vmem:[%s4] sm:$0xf]
    %v42 = vld [vmem:[%s4 + $0x4] sm:$0xf]
    %v43 = vld [vmem:[%s4 + $0x8] sm:$0xf]
    %v44 = vld [vmem:[%s4 + $0xc] sm:$0xf]
    %v45 = vld [vmem:[%s5] sm:$0xf]
    %v46 = vld [vmem:[%s5 + $0x4] sm:$0xf]
    %v47 = vld [vmem:[%s5 + $0x8] sm:$0xf]
    %v48 = vld [vmem:[%s5 + $0xc] sm:$0xf]
    %v49 = vld [vmem:[%s6] sm:$0x1]
    %v50 = vld [vmem:[%s0] sm:$0xf]
    %v51 = vld [vmem:[%s0 + $0x4] sm:$0xf]
    %v52 = vld [vmem:[%s0 + $0x8] sm:$0xf]
    %v53 = vld [vmem:[%s0 + $0xc] sm:$0xf]
    %v54 = vld [vmem:[%s0 + $0x10] sm:$0xf]
    %v55 = vld [vmem:[%s0 + $0x14] sm:$0xf]
    %v56 = vld [vmem:[%s0 + $0x18] sm:$0xf]
    %v57 = vld [vmem:[%s0 + $0x1c] sm:$0xf]
    %v58 = vld [vmem:[%s1] sm:$0xf]
    %v59 = vld [vmem:[%s1 + $0x4] sm:$0xf]
    %v60 = vld [vmem:[%s3] sm:$0x1]
    %v62 = vperm.slane %v60, 0
    %v72 = vunpack.c.l.b16 %v50
    %v73 = vunpack.c.l.b16 %v51
    %v74 = vunpack.c.l.b16 %v52
    %v75 = vunpack.c.l.b16 %v53
    %v76 = vunpack.c.l.b16 %v54
    %v77 = vunpack.c.l.b16 %v55
    %v78 = vunpack.c.l.b16 %v56
    %v79 = vunpack.c.l.b16 %v57
    %v80 = vpack.c.b16 %v73, %v72
    %v81 = vpack.c.b16 %v75, %v74
    %v82 = vpack.c.b16 %v77, %v76
    %v83 = vpack.c.b16 %v79, %v78
    %v86 = vunpack.c.l.b16 %v58
    %v87 = vunpack.c.l.b16 %v59
    %v88 = vpack.c.b16 %v87, %v86
    %vm90 = vcmask 130048
    %v92 = vsel %vm90, %v80, 0
    %v95 = vsel %vm90, %v81, 0
    %v98 = vsel %vm90, %v82, 0
    %v101 = vsel %vm90, %v83, 0
    %103 = vmatpush.bf16.msra.mxu0 0
    %104 = vmatpush.bf16.msra.mxu0 0
    %105 = vmatpush.bf16.msra.mxu0 0
    %106 = vmatpush.bf16.msra.mxu0 0
    %107 = vmatpush.bf16.msra.mxu0 0
    %108 = vmatpush.bf16.msra.mxu0 0
    %109 = vmatpush.bf16.msra.mxu0 0
    %110 = vmatpush.bf16.msra.mxu0 %v88
    %111 = vmatmul.bf16.gmra.mxu0 %v92
    %v112 = vpop.f32.mrf.mxu0
    %v113 = vadd.f32 %v62, %v112
    %v114 = vpop.f32.mrf.mxu0
    %v115 = vadd.f32 %v62, %v114
    %116 = vmatmul.bf16.gmra.mxu0 %v95
    %v117 = vpop.f32.mrf.mxu0
    %v118 = vadd.f32 %v62, %v117
    %v119 = vpop.f32.mrf.mxu0
    %v120 = vadd.f32 %v62, %v119
    %121 = vmatmul.bf16.gmra.mxu0 %v98
    %v122 = vpop.f32.mrf.mxu0
    %v123 = vadd.f32 %v62, %v122
    %v124 = vpop.f32.mrf.mxu0
    %v125 = vadd.f32 %v62, %v124
    %126 = vmatmul.bf16.gmra.mxu0 %v101
    %v127 = vpop.f32.mrf.mxu0
    %v128 = vadd.f32 %v62, %v127
    %v129 = vpop.f32.mrf.mxu0
    %v130 = vadd.f32 %v62, %v129
    %131 = vdwg.mxu0
    %v132 = vtanh.pop %v113
    %v133 = vmul.f32 %v132, 0.5
    %v134 = vadd.f32 %v133, 0.5
    %136 = vrot.lane.b32.xlu0 %v132, 64
    %v137 = vpop.permute.xlu0 %136
    %v139 = vmul.f32 %v134, %v137
    %v140 = vtanh.pop %v139
    %142 = vrot.lane.b32.xlu0 %v140, 96
    %v143 = vpop.permute.xlu0 %142
    %v145 = vmul.f32 %v134, %v143
    %v146 = vpack.c.bf16 %v145, %v145
    %v148 = vperm.slane %v49, 0
    %151 = vrot.lane.b32.xlu0 %v146, 32
    %v152 = vpop.permute.xlu0 %151
    %v157 = vunpack.c.l.b16 %v41
    %v158 = vunpack.c.l.b16 %v42
    %v159 = vunpack.c.l.b16 %v43
    %v160 = vunpack.c.l.b16 %v44
    %v161 = vpack.c.b16 %v158, %v157
    %v162 = vpack.c.b16 %v160, %v159
    %vm165 = vcmask 261120
    %v167 = vsel %vm165, %v152, 0
    %169 = vmatpush.bf16.msra.mxu0 0
    %170 = vmatpush.bf16.msra.mxu0 0
    %171 = vmatpush.bf16.msra.mxu0 0
    %172 = vmatpush.bf16.msra.mxu0 0
    %173 = vmatpush.bf16.msra.mxu0 0
    %174 = vmatpush.bf16.msra.mxu0 0
    %175 = vmatpush.bf16.msra.mxu0 %v162
    %176 = vmatpush.bf16.msra.mxu0 %v161
    %177 = vmatmul.bf16.gmra.mxu0 %v167
    %v178 = vpop.f32.mrf.mxu0
    %v179 = vadd.f32 %v148, %v178
    %v180 = vpop.f32.mrf.mxu0
    %181 = vdwg.mxu0
    %v182 = vtanh.pop %v179
    %v183 = vmul.f32 %v182, 0.5
    %v184 = vadd.f32 %v183, 0.5
    %186 = vrot.lane.b32.xlu0 %v182, 64
    %v187 = vpop.permute.xlu0 %186
    %v189 = vmul.f32 %v184, %v187
    %v190 = vtanh.pop %v189
    %192 = vrot.lane.b32.xlu0 %v190, 96
    %v193 = vpop.permute.xlu0 %192
    %v195 = vmul.f32 %v184, %v193
    %v200 = vunpack.c.l.b16 %v37
    %v201 = vunpack.c.l.b16 %v38
    %v202 = vunpack.c.l.b16 %v39
    %v203 = vunpack.c.l.b16 %v40
    %v204 = vpack.c.b16 %v201, %v200
    %v205 = vpack.c.b16 %v203, %v202
    %208 = vmatpush.bf16.msra.mxu0 0
    %209 = vmatpush.bf16.msra.mxu0 0
    %210 = vmatpush.bf16.msra.mxu0 0
    %211 = vmatpush.bf16.msra.mxu0 0
    %212 = vmatpush.bf16.msra.mxu0 0
    %213 = vmatpush.bf16.msra.mxu0 0
    %214 = vmatpush.bf16.msra.mxu0 %v205
    %215 = vmatpush.bf16.msra.mxu0 %v204
    %216 = vmatmul.bf16.gmra.mxu0 %v167
    %v217 = vpop.f32.mrf.mxu0
    %v218 = vadd.f32 0.0, %v217
    %v219 = vpop.f32.mrf.mxu0
    %220 = vdwg.mxu0
    %v221 = vadd.f32 %v115, %v218
    %v222 = vtanh.pop %v221
    %v223 = vmul.f32 %v222, 0.5
    %v224 = vadd.f32 %v223, 0.5
    %226 = vrot.lane.b32.xlu0 %v139, 32
    %v227 = vpop.permute.xlu0 %226
    %v229 = vmul.f32 %v224, %v227
    %231 = vrot.lane.b32.xlu0 %v222, 64
    %v232 = vpop.permute.xlu0 %231
    %v234 = vmul.f32 %v224, %v232
    %236 = vrot.lane.b32.xlu0 %v234, 32
    %v237 = vpop.permute.xlu0 %236
    %v239 = vadd.f32 %v229, %v237
    %v240 = vtanh.pop %v239
    %242 = vrot.lane.b32.xlu0 %v240, 64
    %v243 = vpop.permute.xlu0 %242
    %v245 = vmul.f32 %v224, %v243
    %v246 = vpack.c.bf16 %v245, %v245
    %v247 = vpack.c.bf16 %v195, %v195
    %249 = vrot.lane.b32.xlu0 %v247, 32
    %v250 = vpop.permute.xlu0 %249
    %v255 = vunpack.c.l.b16 %v45
    %v256 = vunpack.c.l.b16 %v46
    %v257 = vunpack.c.l.b16 %v47
    %v258 = vunpack.c.l.b16 %v48
    %v259 = vpack.c.b16 %v256, %v255
    %v260 = vpack.c.b16 %v258, %v257
    %v264 = vsel %vm165, %v250, 0
    %266 = vmatpush.bf16.msra.mxu0 0
    %267 = vmatpush.bf16.msra.mxu0 0
    %268 = vmatpush.bf16.msra.mxu0 0
    %269 = vmatpush.bf16.msra.mxu0 0
    %270 = vmatpush.bf16.msra.mxu0 0
    %271 = vmatpush.bf16.msra.mxu0 0
    %272 = vmatpush.bf16.msra.mxu0 %v260
    %273 = vmatpush.bf16.msra.mxu0 %v259
    %274 = vmatmul.bf16.gmra.mxu0 %v264
    %v275 = vpop.f32.mrf.mxu0
    %v276 = vadd.f32 0.0, %v275
    %v277 = vpop.f32.mrf.mxu0
    %278 = vdwg.mxu0
    %280 = vrot.lane.b32.xlu0 %v246, 32
    %v281 = vpop.permute.xlu0 %280
    %v283 = vsel %vm165, %v281, 0
    %285 = vmatpush.bf16.msra.mxu0 0
    %286 = vmatpush.bf16.msra.mxu0 0
    %287 = vmatpush.bf16.msra.mxu0 0
    %288 = vmatpush.bf16.msra.mxu0 0
    %289 = vmatpush.bf16.msra.mxu0 0
    %290 = vmatpush.bf16.msra.mxu0 0
    %291 = vmatpush.bf16.msra.mxu0 %v162
    %292 = vmatpush.bf16.msra.mxu0 %v161
    %293 = vmatmul.bf16.gmra.mxu0 %v283
    %v294 = vpop.f32.mrf.mxu0
    %v295 = vadd.f32 %v276, %v294
    %v296 = vpop.f32.mrf.mxu0
    %297 = vdwg.mxu0
    %v298 = vadd.f32 %v295, %v148
    %v299 = vtanh.pop %v298
    %v300 = vmul.f32 %v299, 0.5
    %v301 = vadd.f32 %v300, 0.5
    %303 = vrot.lane.b32.xlu0 %v189, 32
    %v304 = vpop.permute.xlu0 %303
    %v306 = vmul.f32 %v301, %v304
    %308 = vrot.lane.b32.xlu0 %v299, 64
    %v309 = vpop.permute.xlu0 %308
    %v311 = vmul.f32 %v301, %v309
    %313 = vrot.lane.b32.xlu0 %v311, 32
    %v314 = vpop.permute.xlu0 %313
    %v316 = vadd.f32 %v306, %v314
    %v317 = vtanh.pop %v316
    %319 = vrot.lane.b32.xlu0 %v317, 64
    %v320 = vpop.permute.xlu0 %319
    %v322 = vmul.f32 %v301, %v320
    %323 = vmatpush.bf16.msra.mxu0 0
    %324 = vmatpush.bf16.msra.mxu0 0
    %325 = vmatpush.bf16.msra.mxu0 0
    %326 = vmatpush.bf16.msra.mxu0 0
    %327 = vmatpush.bf16.msra.mxu0 0
    %328 = vmatpush.bf16.msra.mxu0 0
    %329 = vmatpush.bf16.msra.mxu0 %v205
    %330 = vmatpush.bf16.msra.mxu0 %v204
    %331 = vmatmul.bf16.gmra.mxu0 %v283
    %v332 = vpop.f32.mrf.mxu0
    %v333 = vadd.f32 0.0, %v332
    %v334 = vpop.f32.mrf.mxu0
    %335 = vdwg.mxu0
    %v336 = vadd.f32 %v118, %v333
    %v337 = vtanh.pop %v336
    %v338 = vmul.f32 %v337, 0.5
    %v339 = vadd.f32 %v338, 0.5
    %v340 = vmul.f32 %v339, %v239
    %342 = vrot.lane.b32.xlu0 %v337, 64
    %v343 = vpop.permute.xlu0 %342
    %v345 = vmul.f32 %v339, %v343
    %347 = vrot.lane.b32.xlu0 %v345, 32
    %v348 = vpop.permute.xlu0 %347
    %v350 = vadd.f32 %v340, %v348
    %v351 = vtanh.pop %v350
    %353 = vrot.lane.b32.xlu0 %v351, 64
    %v354 = vpop.permute.xlu0 %353
    %v356 = vmul.f32 %v339, %v354
    %v357 = vpack.c.bf16 %v356, %v356
    %v358 = vpack.c.bf16 %v322, %v322
    %360 = vrot.lane.b32.xlu0 %v358, 32
    %v361 = vpop.permute.xlu0 %360
    %v363 = vsel %vm165, %v361, 0
    %365 = vmatpush.bf16.msra.mxu0 0
    %366 = vmatpush.bf16.msra.mxu0 0
    %367 = vmatpush.bf16.msra.mxu0 0
    %368 = vmatpush.bf16.msra.mxu0 0
    %369 = vmatpush.bf16.msra.mxu0 0
    %370 = vmatpush.bf16.msra.mxu0 0
    %371 = vmatpush.bf16.msra.mxu0 %v260
    %372 = vmatpush.bf16.msra.mxu0 %v259
    %373 = vmatmul.bf16.gmra.mxu0 %v363
    %v374 = vpop.f32.mrf.mxu0
    %v375 = vadd.f32 0.0, %v374
    %v376 = vpop.f32.mrf.mxu0
    %377 = vdwg.mxu0
    %379 = vrot.lane.b32.xlu0 %v357, 32
    %v380 = vpop.permute.xlu0 %379
    %v382 = vsel %vm165, %v380, 0
    %384 = vmatpush.bf16.msra.mxu0 0
    %385 = vmatpush.bf16.msra.mxu0 0
    %386 = vmatpush.bf16.msra.mxu0 0
    %387 = vmatpush.bf16.msra.mxu0 0
    %388 = vmatpush.bf16.msra.mxu0 0
    %389 = vmatpush.bf16.msra.mxu0 0
    %390 = vmatpush.bf16.msra.mxu0 %v162
    %391 = vmatpush.bf16.msra.mxu0 %v161
    %392 = vmatmul.bf16.gmra.mxu0 %v382
    %v393 = vpop.f32.mrf.mxu0
    %v394 = vadd.f32 %v375, %v393
    %v395 = vpop.f32.mrf.mxu0
    %396 = vdwg.mxu0
    %v397 = vadd.f32 %v394, %v148
    %v398 = vtanh.pop %v397
    %v399 = vmul.f32 %v398, 0.5
    %v400 = vadd.f32 %v399, 0.5
    %v401 = vmul.f32 %v400, %v316
    %403 = vrot.lane.b32.xlu0 %v398, 64
    %v404 = vpop.permute.xlu0 %403
    %v406 = vmul.f32 %v400, %v404
    %408 = vrot.lane.b32.xlu0 %v406, 32
    %v409 = vpop.permute.xlu0 %408
    %v411 = vadd.f32 %v401, %v409
    %v412 = vtanh.pop %v411
    %414 = vrot.lane.b32.xlu0 %v412, 64
    %v415 = vpop.permute.xlu0 %414
    %v417 = vmul.f32 %v400, %v415
    %418 = vmatpush.bf16.msra.mxu0 0
    %419 = vmatpush.bf16.msra.mxu0 0
    %420 = vmatpush.bf16.msra.mxu0 0
    %421 = vmatpush.bf16.msra.mxu0 0
    %422 = vmatpush.bf16.msra.mxu0 0
    %423 = vmatpush.bf16.msra.mxu0 0
    %424 = vmatpush.bf16.msra.mxu0 %v205
    %425 = vmatpush.bf16.msra.mxu0 %v204
    %426 = vmatmul.bf16.gmra.mxu0 %v382
    %v427 = vpop.f32.mrf.mxu0
    %v428 = vadd.f32 0.0, %v427
    %v429 = vpop.f32.mrf.mxu0
    %430 = vdwg.mxu0
    %v431 = vadd.f32 %v120, %v428
    %v432 = vtanh.pop %v431
    %v433 = vmul.f32 %v432, 0.5
    %v434 = vadd.f32 %v433, 0.5
    %v435 = vmul.f32 %v434, %v350
    %437 = vrot.lane.b32.xlu0 %v432, 64
    %v438 = vpop.permute.xlu0 %437
    %v440 = vmul.f32 %v434, %v438
    %442 = vrot.lane.b32.xlu0 %v440, 32
    %v443 = vpop.permute.xlu0 %442
    %v445 = vadd.f32 %v435, %v443
    %v446 = vtanh.pop %v445
    %448 = vrot.lane.b32.xlu0 %v446, 64
    %v449 = vpop.permute.xlu0 %448
    %v451 = vmul.f32 %v434, %v449
    %v452 = vpack.c.bf16 %v451, %v451
    %v453 = vpack.c.bf16 %v417, %v417
    %455 = vrot.lane.b32.xlu0 %v453, 32
    %v456 = vpop.permute.xlu0 %455
    %v458 = vsel %vm165, %v456, 0
    %460 = vmatpush.bf16.msra.mxu0 0
    %461 = vmatpush.bf16.msra.mxu0 0
    %462 = vmatpush.bf16.msra.mxu0 0
    %463 = vmatpush.bf16.msra.mxu0 0
    %464 = vmatpush.bf16.msra.mxu0 0
    %465 = vmatpush.bf16.msra.mxu0 0
    %466 = vmatpush.bf16.msra.mxu0 %v260
    %467 = vmatpush.bf16.msra.mxu0 %v259
    %468 = vmatmul.bf16.gmra.mxu0 %v458
    %v469 = vpop.f32.mrf.mxu0
    %v470 = vadd.f32 0.0, %v469
    %v471 = vpop.f32.mrf.mxu0
    %472 = vdwg.mxu0
    %474 = vrot.lane.b32.xlu0 %v452, 32
    %v475 = vpop.permute.xlu0 %474
    %v477 = vsel %vm165, %v475, 0
    %479 = vmatpush.bf16.msra.mxu0 0
    %480 = vmatpush.bf16.msra.mxu0 0
    %481 = vmatpush.bf16.msra.mxu0 0
    %482 = vmatpush.bf16.msra.mxu0 0
    %483 = vmatpush.bf16.msra.mxu0 0
    %484 = vmatpush.bf16.msra.mxu0 0
    %485 = vmatpush.bf16.msra.mxu0 %v162
    %486 = vmatpush.bf16.msra.mxu0 %v161
    %487 = vmatmul.bf16.gmra.mxu0 %v477
    %v488 = vpop.f32.mrf.mxu0
    %v489 = vadd.f32 %v470, %v488
    %v490 = vpop.f32.mrf.mxu0
    %491 = vdwg.mxu0
    %v492 = vadd.f32 %v489, %v148
    %v493 = vtanh.pop %v492
    %v494 = vmul.f32 %v493, 0.5
    %v495 = vadd.f32 %v494, 0.5
    %v496 = vmul.f32 %v495, %v411
    %498 = vrot.lane.b32.xlu0 %v493, 64
    %v499 = vpop.permute.xlu0 %498
    %v501 = vmul.f32 %v495, %v499
    %503 = vrot.lane.b32.xlu0 %v501, 32
    %v504 = vpop.permute.xlu0 %503
    %v506 = vadd.f32 %v496, %v504
    %v507 = vtanh.pop %v506
    %509 = vrot.lane.b32.xlu0 %v507, 64
    %v510 = vpop.permute.xlu0 %509
    %v512 = vmul.f32 %v495, %v510
    %513 = vmatpush.bf16.msra.mxu0 0
    %514 = vmatpush.bf16.msra.mxu0 0
    %515 = vmatpush.bf16.msra.mxu0 0
    %516 = vmatpush.bf16.msra.mxu0 0
    %517 = vmatpush.bf16.msra.mxu0 0
    %518 = vmatpush.bf16.msra.mxu0 0
    %519 = vmatpush.bf16.msra.mxu0 %v205
    %520 = vmatpush.bf16.msra.mxu0 %v204
    %521 = vmatmul.bf16.gmra.mxu0 %v477
    %v522 = vpop.f32.mrf.mxu0
    %v523 = vadd.f32 0.0, %v522
    %v524 = vpop.f32.mrf.mxu0
    %525 = vdwg.mxu0
    %v526 = vadd.f32 %v123, %v523
    %v527 = vtanh.pop %v526
    %v528 = vmul.f32 %v527, 0.5
    %v529 = vadd.f32 %v528, 0.5
    %v530 = vmul.f32 %v529, %v445
    %532 = vrot.lane.b32.xlu0 %v527, 64
    %v533 = vpop.permute.xlu0 %532
    %v535 = vmul.f32 %v529, %v533
    %537 = vrot.lane.b32.xlu0 %v535, 32
    %v538 = vpop.permute.xlu0 %537
    %v540 = vadd.f32 %v530, %v538
    %v541 = vtanh.pop %v540
    %543 = vrot.lane.b32.xlu0 %v541, 64
    %v544 = vpop.permute.xlu0 %543
    %v546 = vmul.f32 %v529, %v544
    %v547 = vpack.c.bf16 %v546, %v546
    %v548 = vpack.c.bf16 %v512, %v512
    %550 = vrot.lane.b32.xlu0 %v548, 32
    %v551 = vpop.permute.xlu0 %550
    %v553 = vsel %vm165, %v551, 0
    %555 = vmatpush.bf16.msra.mxu0 0
    %556 = vmatpush.bf16.msra.mxu0 0
    %557 = vmatpush.bf16.msra.mxu0 0
    %558 = vmatpush.bf16.msra.mxu0 0
    %559 = vmatpush.bf16.msra.mxu0 0
    %560 = vmatpush.bf16.msra.mxu0 0
    %561 = vmatpush.bf16.msra.mxu0 %v260
    %562 = vmatpush.bf16.msra.mxu0 %v259
    %563 = vmatmul.bf16.gmra.mxu0 %v553
    %v564 = vpop.f32.mrf.mxu0
    %v565 = vadd.f32 0.0, %v564
    %v566 = vpop.f32.mrf.mxu0
    %567 = vdwg.mxu0
    %569 = vrot.lane.b32.xlu0 %v547, 32
    %v570 = vpop.permute.xlu0 %569
    %v572 = vsel %vm165, %v570, 0
    %574 = vmatpush.bf16.msra.mxu0 0
    %575 = vmatpush.bf16.msra.mxu0 0
    %576 = vmatpush.bf16.msra.mxu0 0
    %577 = vmatpush.bf16.msra.mxu0 0
    %578 = vmatpush.bf16.msra.mxu0 0
    %579 = vmatpush.bf16.msra.mxu0 0
    %580 = vmatpush.bf16.msra.mxu0 %v162
    %581 = vmatpush.bf16.msra.mxu0 %v161
    %582 = vmatmul.bf16.gmra.mxu0 %v572
    %v583 = vpop.f32.mrf.mxu0
    %v584 = vadd.f32 %v565, %v583
    %v585 = vpop.f32.mrf.mxu0
    %586 = vdwg.mxu0
    %v587 = vadd.f32 %v584, %v148
    %v588 = vtanh.pop %v587
    %v589 = vmul.f32 %v588, 0.5
    %v590 = vadd.f32 %v589, 0.5
    %v591 = vmul.f32 %v590, %v506
    %593 = vrot.lane.b32.xlu0 %v588, 64
    %v594 = vpop.permute.xlu0 %593
    %v596 = vmul.f32 %v590, %v594
    %598 = vrot.lane.b32.xlu0 %v596, 32
    %v599 = vpop.permute.xlu0 %598
    %v601 = vadd.f32 %v591, %v599
    %v602 = vtanh.pop %v601
    %604 = vrot.lane.b32.xlu0 %v602, 64
    %v605 = vpop.permute.xlu0 %604
    %v607 = vmul.f32 %v590, %v605
    %608 = vmatpush.bf16.msra.mxu0 0
    %609 = vmatpush.bf16.msra.mxu0 0
    %610 = vmatpush.bf16.msra.mxu0 0
    %611 = vmatpush.bf16.msra.mxu0 0
    %612 = vmatpush.bf16.msra.mxu0 0
    %613 = vmatpush.bf16.msra.mxu0 0
    %614 = vmatpush.bf16.msra.mxu0 %v205
    %615 = vmatpush.bf16.msra.mxu0 %v204
    %616 = vmatmul.bf16.gmra.mxu0 %v572
    %v617 = vpop.f32.mrf.mxu0
    %v618 = vadd.f32 0.0, %v617
    %v619 = vpop.f32.mrf.mxu0
    %620 = vdwg.mxu0
    %v621 = vadd.f32 %v125, %v618
    %v622 = vtanh.pop %v621
    %v623 = vmul.f32 %v622, 0.5
    %v624 = vadd.f32 %v623, 0.5
    %v625 = vmul.f32 %v624, %v540
    %627 = vrot.lane.b32.xlu0 %v622, 64
    %v628 = vpop.permute.xlu0 %627
    %v630 = vmul.f32 %v624, %v628
    %632 = vrot.lane.b32.xlu0 %v630, 32
    %v633 = vpop.permute.xlu0 %632
    %v635 = vadd.f32 %v625, %v633
    %v636 = vtanh.pop %v635
    %638 = vrot.lane.b32.xlu0 %v636, 64
    %v639 = vpop.permute.xlu0 %638
    %v641 = vmul.f32 %v624, %v639
    %v642 = vpack.c.bf16 %v641, %v641
    %v643 = vpack.c.bf16 %v607, %v607
    %645 = vrot.lane.b32.xlu0 %v643, 32
    %v646 = vpop.permute.xlu0 %645
    %v648 = vsel %vm165, %v646, 0
    %650 = vmatpush.bf16.msra.mxu0 0
    %651 = vmatpush.bf16.msra.mxu0 0
    %652 = vmatpush.bf16.msra.mxu0 0
    %653 = vmatpush.bf16.msra.mxu0 0
    %654 = vmatpush.bf16.msra.mxu0 0
    %655 = vmatpush.bf16.msra.mxu0 0
    %656 = vmatpush.bf16.msra.mxu0 %v260
    %657 = vmatpush.bf16.msra.mxu0 %v259
    %658 = vmatmul.bf16.gmra.mxu0 %v648
    %v659 = vpop.f32.mrf.mxu0
    %v660 = vadd.f32 0.0, %v659
    %v661 = vpop.f32.mrf.mxu0
    %662 = vdwg.mxu0
    %664 = vrot.lane.b32.xlu0 %v642, 32
    %v665 = vpop.permute.xlu0 %664
    %v667 = vsel %vm165, %v665, 0
    %669 = vmatpush.bf16.msra.mxu0 0
    %670 = vmatpush.bf16.msra.mxu0 0
    %671 = vmatpush.bf16.msra.mxu0 0
    %672 = vmatpush.bf16.msra.mxu0 0
    %673 = vmatpush.bf16.msra.mxu0 0
    %674 = vmatpush.bf16.msra.mxu0 0
    %675 = vmatpush.bf16.msra.mxu0 %v162
    %676 = vmatpush.bf16.msra.mxu0 %v161
    %677 = vmatmul.bf16.gmra.mxu0 %v667
    %v678 = vpop.f32.mrf.mxu0
    %v679 = vadd.f32 %v660, %v678
    %v680 = vpop.f32.mrf.mxu0
    %681 = vdwg.mxu0
    %v682 = vadd.f32 %v679, %v148
    %v683 = vtanh.pop %v682
    %v684 = vmul.f32 %v683, 0.5
    %v685 = vadd.f32 %v684, 0.5
    %v686 = vmul.f32 %v685, %v601
    %688 = vrot.lane.b32.xlu0 %v683, 64
    %v689 = vpop.permute.xlu0 %688
    %v691 = vmul.f32 %v685, %v689
    %693 = vrot.lane.b32.xlu0 %v691, 32
    %v694 = vpop.permute.xlu0 %693
    %v696 = vadd.f32 %v686, %v694
    %v697 = vtanh.pop %v696
    %699 = vrot.lane.b32.xlu0 %v697, 64
    %v700 = vpop.permute.xlu0 %699
    %v702 = vmul.f32 %v685, %v700
    %703 = vmatpush.bf16.msra.mxu0 0
    %704 = vmatpush.bf16.msra.mxu0 0
    %705 = vmatpush.bf16.msra.mxu0 0
    %706 = vmatpush.bf16.msra.mxu0 0
    %707 = vmatpush.bf16.msra.mxu0 0
    %708 = vmatpush.bf16.msra.mxu0 0
    %709 = vmatpush.bf16.msra.mxu0 %v205
    %710 = vmatpush.bf16.msra.mxu0 %v204
    %711 = vmatmul.bf16.gmra.mxu0 %v667
    %v712 = vpop.f32.mrf.mxu0
    %v713 = vadd.f32 0.0, %v712
    %v714 = vpop.f32.mrf.mxu0
    %715 = vdwg.mxu0
    %v716 = vadd.f32 %v128, %v713
    %v717 = vtanh.pop %v716
    %v718 = vmul.f32 %v717, 0.5
    %v719 = vadd.f32 %v718, 0.5
    %v720 = vmul.f32 %v719, %v635
    %722 = vrot.lane.b32.xlu0 %v717, 64
    %v723 = vpop.permute.xlu0 %722
    %v725 = vmul.f32 %v719, %v723
    %727 = vrot.lane.b32.xlu0 %v725, 32
    %v728 = vpop.permute.xlu0 %727
    %v730 = vadd.f32 %v720, %v728
    %v731 = vtanh.pop %v730
    %733 = vrot.lane.b32.xlu0 %v731, 64
    %v734 = vpop.permute.xlu0 %733
    %v736 = vmul.f32 %v719, %v734
    %v737 = vpack.c.bf16 %v736, %v736
    %v738 = vpack.c.bf16 %v702, %v702
    %740 = vrot.lane.b32.xlu0 %v738, 32
    %v741 = vpop.permute.xlu0 %740
    %v743 = vsel %vm165, %v741, 0
    %745 = vmatpush.bf16.msra.mxu0 0
    %746 = vmatpush.bf16.msra.mxu0 0
    %747 = vmatpush.bf16.msra.mxu0 0
    %748 = vmatpush.bf16.msra.mxu0 0
    %749 = vmatpush.bf16.msra.mxu0 0
    %750 = vmatpush.bf16.msra.mxu0 0
    %751 = vmatpush.bf16.msra.mxu0 %v260
    %752 = vmatpush.bf16.msra.mxu0 %v259
    %753 = vmatmul.bf16.gmra.mxu0 %v743
    %v754 = vpop.f32.mrf.mxu0
    %v755 = vadd.f32 0.0, %v754
    %v756 = vpop.f32.mrf.mxu0
    %757 = vdwg.mxu0
    %759 = vrot.lane.b32.xlu0 %v737, 32
    %v760 = vpop.permute.xlu0 %759
    %v762 = vsel %vm165, %v760, 0
    %764 = vmatpush.bf16.msra.mxu0 0
    %765 = vmatpush.bf16.msra.mxu0 0
    %766 = vmatpush.bf16.msra.mxu0 0
    %767 = vmatpush.bf16.msra.mxu0 0
    %768 = vmatpush.bf16.msra.mxu0 0
    %769 = vmatpush.bf16.msra.mxu0 0
    %770 = vmatpush.bf16.msra.mxu0 %v162
    %771 = vmatpush.bf16.msra.mxu0 %v161
    %772 = vmatmul.bf16.gmra.mxu0 %v762
    %v773 = vpop.f32.mrf.mxu0
    %v774 = vadd.f32 %v755, %v773
    %v775 = vpop.f32.mrf.mxu0
    %776 = vdwg.mxu0
    %v777 = vadd.f32 %v774, %v148
    %v778 = vtanh.pop %v777
    %v779 = vmul.f32 %v778, 0.5
    %v780 = vadd.f32 %v779, 0.5
    %v781 = vmul.f32 %v780, %v696
    %783 = vrot.lane.b32.xlu0 %v778, 64
    %v784 = vpop.permute.xlu0 %783
    %v786 = vmul.f32 %v780, %v784
    %788 = vrot.lane.b32.xlu0 %v786, 32
    %v789 = vpop.permute.xlu0 %788
    %v791 = vadd.f32 %v781, %v789
    %v792 = vtanh.pop %v791
    %794 = vrot.lane.b32.xlu0 %v792, 64
    %v795 = vpop.permute.xlu0 %794
    %v797 = vmul.f32 %v780, %v795
    %798 = vmatpush.bf16.msra.mxu0 0
    %799 = vmatpush.bf16.msra.mxu0 0
    %800 = vmatpush.bf16.msra.mxu0 0
    %801 = vmatpush.bf16.msra.mxu0 0
    %802 = vmatpush.bf16.msra.mxu0 0
    %803 = vmatpush.bf16.msra.mxu0 0
    %804 = vmatpush.bf16.msra.mxu0 %v205
    %805 = vmatpush.bf16.msra.mxu0 %v204
    %806 = vmatmul.bf16.gmra.mxu0 %v762
    %v807 = vpop.f32.mrf.mxu0
    %v808 = vadd.f32 0.0, %v807
    %v809 = vpop.f32.mrf.mxu0
    %810 = vdwg.mxu0
    %v811 = vadd.f32 %v130, %v808
    %v812 = vtanh.pop %v811
    %v813 = vmul.f32 %v812, 0.5
    %v814 = vadd.f32 %v813, 0.5
    %v815 = vmul.f32 %v814, %v730
    %817 = vrot.lane.b32.xlu0 %v812, 64
    %v818 = vpop.permute.xlu0 %817
    %v820 = vmul.f32 %v814, %v818
    %822 = vrot.lane.b32.xlu0 %v820, 32
    %v823 = vpop.permute.xlu0 %822
    %v825 = vadd.f32 %v815, %v823
    %v826 = vtanh.pop %v825
    %828 = vrot.lane.b32.xlu0 %v826, 64
    %v829 = vpop.permute.xlu0 %828
    %v831 = vmul.f32 %v814, %v829
    %v832 = vpack.c.bf16 %v831, %v831
    %v833 = vpack.c.bf16 %v797, %v797
    %835 = vrot.lane.b32.xlu0 %v833, 32
    %v836 = vpop.permute.xlu0 %835
    %v838 = vsel %vm165, %v836, 0
    %840 = vmatpush.bf16.msra.mxu0 0
    %841 = vmatpush.bf16.msra.mxu0 0
    %842 = vmatpush.bf16.msra.mxu0 0
    %843 = vmatpush.bf16.msra.mxu0 0
    %844 = vmatpush.bf16.msra.mxu0 0
    %845 = vmatpush.bf16.msra.mxu0 0
    %846 = vmatpush.bf16.msra.mxu0 %v260
    %847 = vmatpush.bf16.msra.mxu0 %v259
    %848 = vmatmul.bf16.gmra.mxu0 %v838
    %v849 = vpop.f32.mrf.mxu0
    %v850 = vadd.f32 0.0, %v849
    %v851 = vpop.f32.mrf.mxu0
    %852 = vdwg.mxu0
    %854 = vrot.lane.b32.xlu0 %v832, 32
    %v855 = vpop.permute.xlu0 %854
    %v857 = vsel %vm165, %v855, 0
    %859 = vmatpush.bf16.msra.mxu0 0
    %860 = vmatpush.bf16.msra.mxu0 0
    %861 = vmatpush.bf16.msra.mxu0 0
    %862 = vmatpush.bf16.msra.mxu0 0
    %863 = vmatpush.bf16.msra.mxu0 0
    %864 = vmatpush.bf16.msra.mxu0 0
    %865 = vmatpush.bf16.msra.mxu0 %v162
    %866 = vmatpush.bf16.msra.mxu0 %v161
    %867 = vmatmul.bf16.gmra.mxu0 %v857
    %v868 = vpop.f32.mrf.mxu0
    %v869 = vadd.f32 %v850, %v868
    %v870 = vpop.f32.mrf.mxu0
    %871 = vdwg.mxu0
    %v872 = vadd.f32 %v869, %v148
    %v873 = vmul.f32 %v872, 2.0
    %v874 = vmul.f32 %v873, %v831
    %v875 = vadd.f32 %v797, %v874
    %v876 = vld [vmem:[%s9] sm:$0xff]
    %vm877 = vcmask 64512
    %v878 = vsel %vm877, %v876, 0.0
    %879 = vadd.xlane.f32.xlu0 %v878
    %v880 = vpop.xlane.xlu0 %879
    %v881 = vrcp.pop 8.0
    %v882 = vmul.f32 8.0, %v881
    %v883 = vsub.f32 1.0, %v882
    %v884 = vmul.f32 %v881, %v883
    %v885 = vadd.f32 %v881, %v884
    %vm886 = vweird.f32 %v881
    %v887 = vsel %vm886, %v881, %v885
    %v888 = vmul.f32 %v880, %v887
    %v889 = vpack.c.bf16 %v875, %v875
    %v890 = vld [vmem:[%s7] sm:$0xf]
    %v891 = vld [vmem:[%s7 + $0x4] sm:$0xf]
    %v892 = vld [vmem:[%s7 + $0x8] sm:$0xf]
    %v893 = vld [vmem:[%s7 + $0xc] sm:$0xf]
    %v894 = vld [vmem:[%s8] sm:$0x1]
    %v896 = vperm.slane %v894, 0
    %899 = vrot.lane.b32.xlu0 %v889, 32
    %v900 = vpop.permute.xlu0 %899
    %v905 = vunpack.c.l.b16 %v890
    %v906 = vunpack.c.l.b16 %v891
    %v907 = vunpack.c.l.b16 %v892
    %v908 = vunpack.c.l.b16 %v893
    %v909 = vpack.c.b16 %v906, %v905
    %v910 = vpack.c.b16 %v908, %v907
    %v914 = vsel %vm165, %v900, 0
    %916 = vmatpush.bf16.msra.mxu0 0
    %917 = vmatpush.bf16.msra.mxu0 0
    %918 = vmatpush.bf16.msra.mxu0 0
    %919 = vmatpush.bf16.msra.mxu0 0
    %920 = vmatpush.bf16.msra.mxu0 0
    %921 = vmatpush.bf16.msra.mxu0 0
    %922 = vmatpush.bf16.msra.mxu0 %v910
    %923 = vmatpush.bf16.msra.mxu0 %v909
    %924 = vmatmul.bf16.gmra.mxu0 %v914
    %v925 = vpop.f32.mrf.mxu0
    %v926 = vadd.f32 %v896, %v925
    %v927 = vpop.f32.mrf.mxu0
    %928 = vdwg.mxu0
    %v929 = vadd.f32 %v926, %v888
    %930 = vst.msk [vmem:[#allocation2] sm:$0xff] %vm90, %v929
    // Predicated region
    $region42: #{pred_forward.1} parent=1 // pred_check
      _
    $region43: #{pred_forward.1} parent=1 // pred_check_branch
      %932 = sbr.rel (0) target = $region45
    $region44: #{pred_forward.1} parent=1 // pred_region
      %934 = vsyncadd [#allocation3], 0
      %s936 = sshll.u32 [#allocation2], 4
      %s937 = int_to_ptr.vmem [resolvable:$true] %s936
      %s938 = sshll.u32 %s10, 4
      %s939 = int_to_ptr.hbm [resolvable:$true] %s938
      %941 = dma.vmem_to_hbm [thread:$0]  %s937, 128, %s939, [#allocation3]
    $region45: #{pred_forward.1} parent=1 // pred_fallthru
      _
    // Predicated region
    $region46: #{pred_forward.1} parent=1 // pred_check
      _
    $region47: #{pred_forward.1} parent=1 // pred_check_branch
      %943 = sbr.rel (0) target = $region49
    $region48: #{pred_forward.1} parent=1 // pred_region
      %945 = dma.done [#allocation3], 128
    $region49: #{pred_forward.1} parent=1 // pred_fallthru
      _
    %946 = vsyncpa [#allocation3], 1

</llo_original>
